<compile_context>
chip_gen: v7x
topology: tpu7x:2x2x1
jax: 0.10.0
libtpu: 0.0.40
codegen_flags: <defaults>
</compile_context>

<pallas_src>
import numpy as np
import jax
import jax.numpy as jnp
from jax.experimental import pallas as pl
from jax.experimental.pallas import tpu as pltpu

# ----------------------------- configuration --------------------------------
WIDTH = 32          # d_model
LAYERS = 2
HEADS = 4           # head_dim = 8
SEQ = 8             # sequence length
BATCH = 2

# f32 for exact parity with the PyTorch module at this toy size.  Set to
# jnp.bfloat16 on v6e/v7x at real CLIP widths (accumulation stays float32).
MATMUL_DTYPE = jnp.float32

_PARAM_ORDER = ("ln1_g", "ln1_b", "in_w", "in_b", "out_w", "out_b",
                "ln2_g", "ln2_b", "fc1_w", "fc1_b", "fc2_w", "fc2_b")


# ----------------------------- kernel helpers --------------------------------

def _dot(a, b, contract):
    """Unbatched dot_general with explicit contraction dims (no .T materialized)."""
    return jax.lax.dot_general(
        a.astype(MATMUL_DTYPE), b.astype(MATMUL_DTYPE),
        dimension_numbers=(contract, ((), ())),
        preferred_element_type=jnp.float32)


def _bdot(a, b, contract, batch):
    """Head-batched dot_general (batch dim = heads)."""
    return jax.lax.dot_general(
        a.astype(MATMUL_DTYPE), b.astype(MATMUL_DTYPE),
        dimension_numbers=(contract, batch),
        preferred_element_type=jnp.float32)


def _layernorm(v, g, b):
    mean = jnp.mean(v, axis=-1, keepdims=True)
    var = jnp.mean(jnp.square(v - mean), axis=-1, keepdims=True)
    return (v - mean) * jax.lax.rsqrt(var + 1e-5) * g + b


# ----------------------------- fused per-layer kernel ------------------------

def _make_block_kernel(seq, heads, width, use_mask):
    head_dim = width // heads
    scale = head_dim ** -0.5

    def kernel(x_ref, *refs):
        if use_mask:
            mask_ref, refs = refs[0], refs[1:]
        (ln1_g_ref, ln1_b_ref, in_w_ref, in_b_ref, out_w_ref, out_b_ref,
         ln2_g_ref, ln2_b_ref, fc1_w_ref, fc1_b_ref, fc2_w_ref, fc2_b_ref,
         o_ref) = refs

        # Layer 0: seed the VMEM-resident residual-stream accumulator (o_ref
        # keeps the same block index across the layer axis, so it stays
        # resident and is only flushed to HBM when the batch block changes).
        @pl.when(pl.program_id(1) == 0)
        def _():
            o_ref[...] = x_ref[...]

        x = o_ref[0]                                          # (L, D) float32

        # ---- pre-LN multi-head self-attention ---------------------------
        h = _layernorm(x, ln1_g_ref[0], ln1_b_ref[0])         # (L, D)

        # Fused QKV projection: in_w is (3D, D) (torch in_proj layout,
        # head-major rows).  One MXU matmul -> (3D, L); leading-dim reshape
        # (tile-preserving: head_dim is a multiple of the sublane count)
        # gives a head-major slab with heads on a LEADING axis.
        qkv = _dot(in_w_ref[0], h, ((1,), (1,))) + in_b_ref[0]   # (3D, L)
        qkv = qkv.reshape(3 * heads, head_dim, seq)              # (3H, hd, L)
        q = qkv[0:heads] * scale                                 # (H, hd, L)
        k = qkv[heads:2 * heads]                                 # (H, hd, L)
        v = qkv[2 * heads:]                                      # (H, hd, L)

        # scores: contract head_dim, batch over heads — one batched matmul.
        s = _bdot(q, k, ((1,), (1,)), ((0,), (0,)))              # (H, Lq, Lk)
        if use_mask:
            s = s + mask_ref[...]                                # (L, L) bcast
        s = s - jnp.max(s, axis=-1, keepdims=True)
        p = jnp.exp(s)
        p = p * pl.reciprocal(jnp.sum(p, axis=-1, keepdims=True), approx=True)

        # p·v: contract Lk, batch over heads.
        o = _bdot(p, v, ((2,), (2,)), ((0,), (0,)))              # (H, Lq, hd)

        # Output projection: out_w pre-arranged (H, hd, D); batched per head
        # then summed over the leading head axis (cheap VPU adds) — replaces
        # the old concat-then-project and avoids any lane shuffles.
        attn = _bdot(o, out_w_ref[0], ((2,), (1,)), ((0,), (0,)))  # (H, Lq, D)
        attn = jnp.sum(attn, axis=0) + out_b_ref[0]                # (Lq, D)
        x = x + attn

        # ---- pre-LN MLP: c_fc -> QuickGELU -> c_proj ---------------------
        h = _layernorm(x, ln2_g_ref[0], ln2_b_ref[0])
        h1 = _dot(h, fc1_w_ref[0], ((1,), (0,))) + fc1_b_ref[0]    # (L, 4D)
        h1 = h1 * jax.nn.sigmoid(1.702 * h1)                       # QuickGELU f32
        x = x + _dot(h1, fc2_w_ref[0], ((1,), (0,))) + fc2_b_ref[0]

        o_ref[0] = x

    return kernel


# ----------------------------- wrapper ---------------------------------------

def transformer_forward(x, params, attn_mask=None, heads=HEADS):
    """x: (seq, batch, width) float32 — torch nn.MultiheadAttention convention.
    Returns (seq, batch, width)."""
    L, B, D = x.shape
    layers = params["in_w"].shape[0]
    assert D % heads == 0, "width must be divisible by heads"
    hd = D // heads

    # Layout plumbing (outside the kernel; at real scale store weights in the
    # kernel layout so these one-time transposes/reshapes disappear).
    kp = dict(
        ln1_g=params["ln1_g"], ln1_b=params["ln1_b"],
        in_w=jnp.transpose(params["in_w"], (0, 2, 1)),       # (layers, 3D, D)
        in_b=params["in_b"].reshape(layers, 3 * D, 1),        # (layers, 3D, 1)
        out_w=params["out_w"].reshape(layers, heads, hd, D),  # (layers, H, hd, D)
        out_b=params["out_b"],                                 # (layers, 1, D)
        ln2_g=params["ln2_g"], ln2_b=params["ln2_b"],
        fc1_w=params["fc1_w"], fc1_b=params["fc1_b"],
        fc2_w=params["fc2_w"], fc2_b=params["fc2_b"],
    )

    x3d = jnp.transpose(x, (1, 0, 2)).astype(jnp.float32)     # (B, L, D)

    use_mask = attn_mask is not None
    inputs = [x3d]
    in_specs = [pl.BlockSpec((1, L, D), lambda b, l: (b, 0, 0))]
    if use_mask:
        inputs.append(attn_mask.astype(jnp.float32))
        in_specs.append(pl.BlockSpec((L, L), lambda b, l: (0, 0)))

    def wspec(arr):
        rest = arr.shape[1:]
        return pl.BlockSpec((1,) + rest,
                            lambda b, l, _n=len(rest): (l,) + (0,) * _n)

    for name in _PARAM_ORDER:
        inputs.append(kp[name])
        in_specs.append(wspec(kp[name]))

    kernel = _make_block_kernel(L, heads, D, use_mask)
    out = pl.pallas_call(
        kernel,
        out_shape=jax.ShapeDtypeStruct((B, L, D), jnp.float32),
        grid_spec=pltpu.PrefetchScalarGridSpec(
            num_scalar_prefetch=0,
            grid=(B, layers),                     # batch parallel, layers arbitrary
            in_specs=in_specs,
            out_specs=pl.BlockSpec((1, L, D), lambda b, l: (b, 0, 0)),
        ),
        compiler_params=pltpu.CompilerParams(
            dimension_semantics=("parallel", "arbitrary"),
            vmem_limit_bytes=64 * 1024 * 1024),
    )(*inputs)
    return jnp.transpose(out, (1, 0, 2))


# TODO(synk): DropPath / attention dropout are identity at inference
# (dropout=0.0 default in the reference module), so they are not implemented.


# ----------------------------- parameter init --------------------------------

def init_transformer_params(key, width=WIDTH, layers=LAYERS):
    ks = iter(jax.random.split(key, 16))

    def nrm(shape, std):
        return (std * jax.random.normal(next(ks), shape)).astype(jnp.float32)

    attn_std = width ** -0.5
    proj_std = (width ** -0.5) * ((2 * layers) ** -0.5)
    fc_std = (2 * width) ** -0.5
    return dict(
        ln1_g=jnp.ones((layers, 1, width), jnp.float32),
        ln1_b=jnp.zeros((layers, 1, width), jnp.float32),
        in_w=nrm((layers, width, 3 * width), attn_std),
        in_b=nrm((layers, 1, 3 * width), 0.01),
        out_w=nrm((layers, width, width), proj_std),
        out_b=nrm((layers, 1, width), 0.01),
        ln2_g=jnp.ones((layers, 1, width), jnp.float32),
        ln2_b=jnp.zeros((layers, 1, width), jnp.float32),
        fc1_w=nrm((layers, width, 4 * width), fc_std),
        fc1_b=nrm((layers, 1, 4 * width), 0.01),
        fc2_w=nrm((layers, 4 * width, width), proj_std),
        fc2_b=nrm((layers, 1, width), 0.01),
    )


# ----------------------------- pure-JAX reference ----------------------------

def transformer_reference(x, params, attn_mask=None, heads=HEADS):
    L, B, D = x.shape
    hd = D // heads
    xb = jnp.transpose(x, (1, 0, 2))                          # (B, L, D)
    layers = params["in_w"].shape[0]

    def ln(v, g, b):
        m = jnp.mean(v, -1, keepdims=True)
        var = jnp.mean(jnp.square(v - m), -1, keepdims=True)
        return (v - m) / jnp.sqrt(var + 1e-5) * g + b

    for l in range(layers):
        h = ln(xb, params["ln1_g"][l, 0], params["ln1_b"][l, 0])
        qkv = h @ params["in_w"][l] + params["in_b"][l, 0]
        q, k, v = jnp.split(qkv, 3, axis=-1)
        q = q.reshape(B, L, heads, hd).transpose(0, 2, 1, 3) * hd ** -0.5
        k = k.reshape(B, L, heads, hd).transpose(0, 2, 1, 3)
        v = v.reshape(B, L, heads, hd).transpose(0, 2, 1, 3)
        s = jnp.einsum("bhqd,bhkd->bhqk", q, k)
        if attn_mask is not None:
            s = s + attn_mask
        p = jax.nn.softmax(s, axis=-1)
        o = jnp.einsum("bhqk,bhkd->bhqd", p, v).transpose(0, 2, 1, 3).reshape(B, L, D)
        xb = xb + o @ params["out_w"][l] + params["out_b"][l, 0]
        h = ln(xb, params["ln2_g"][l, 0], params["ln2_b"][l, 0])
        h1 = h @ params["fc1_w"][l] + params["fc1_b"][l, 0]
        h1 = h1 * jax.nn.sigmoid(1.702 * h1)
        xb = xb + h1 @ params["fc2_w"][l] + params["fc2_b"][l, 0]
    return jnp.transpose(xb, (1, 0, 2))


# ----------------------------------- main -------------------------------------

if __name__ == "__main__":
    key = jax.random.PRNGKey(0)
    pkey, xkey = jax.random.split(key)
    params = init_transformer_params(pkey)

    # CLIP-text-style causal mask (large finite negative instead of -inf:
    # NaN-safe, numerically identical after exp underflow).
    causal_mask = jnp.triu(jnp.full((SEQ, SEQ), -1e9, jnp.float32), k=1)

    x = jax.random.normal(xkey, (SEQ, BATCH, WIDTH), dtype=jnp.float32)

    fwd = jax.jit(lambda inp: transformer_forward(inp, params, causal_mask, heads=HEADS))
    out = fwd(x)
    jax.block_until_ready(out)

    assert out.shape == (SEQ, BATCH, WIDTH)
    assert bool(jnp.all(jnp.isfinite(out)))

    ref = transformer_reference(x, params, causal_mask, heads=HEADS)
    err = float(np.max(np.abs(np.asarray(out) - np.asarray(ref))))
    assert np.allclose(np.asarray(out), np.asarray(ref), atol=1e-2, rtol=1e-2), err

    print("KERNEL_OK")
</pallas_src>

<mosaic_0001>
module attributes {stable_mosaic.version = 11 : i64} {
  func.func @kernel(%arg0: i32, %arg1: i32, %arg2: memref<1x8x32xf32, #tpu.memory_space<vmem>>, %arg3: memref<8x8xf32, #tpu.memory_space<vmem>>, %arg4: memref<1x1x32xf32, #tpu.memory_space<vmem>>, %arg5: memref<1x1x32xf32, #tpu.memory_space<vmem>>, %arg6: memref<1x96x32xf32, #tpu.memory_space<vmem>>, %arg7: memref<1x96x1xf32, #tpu.memory_space<vmem>>, %arg8: memref<1x4x8x32xf32, #tpu.memory_space<vmem>>, %arg9: memref<1x1x32xf32, #tpu.memory_space<vmem>>, %arg10: memref<1x1x32xf32, #tpu.memory_space<vmem>>, %arg11: memref<1x1x32xf32, #tpu.memory_space<vmem>>, %arg12: memref<1x32x128xf32, #tpu.memory_space<vmem>>, %arg13: memref<1x1x128xf32, #tpu.memory_space<vmem>>, %arg14: memref<1x128x32xf32, #tpu.memory_space<vmem>>, %arg15: memref<1x1x32xf32, #tpu.memory_space<vmem>>, %arg16: memref<1x8x32xf32, #tpu.memory_space<vmem>>) attributes {dimension_semantics = [#tpu.dimension_semantics<parallel>, #tpu.dimension_semantics<arbitrary>], iteration_bounds = array<i64: 2, 2>, scalar_prefetch = 0 : i64, scratch_operands = 0 : i64, tpu.core_type = #tpu.core_type<tc>, window_params = [{transform_indices = @transform_0, window_bounds = array<i64: 1, 8, 32>}, {pipeline_mode = #tpu.pipeline_mode<synchronous>, transform_indices = @transform_1, window_bounds = array<i64: 8, 8>}, {transform_indices = @transform_2, window_bounds = array<i64: 1, 1, 32>}, {transform_indices = @transform_3, window_bounds = array<i64: 1, 1, 32>}, {transform_indices = @transform_4, window_bounds = array<i64: 1, 96, 32>}, {transform_indices = @transform_5, window_bounds = array<i64: 1, 96, 1>}, {transform_indices = @transform_6, window_bounds = array<i64: 1, 4, 8, 32>}, {transform_indices = @transform_7, window_bounds = array<i64: 1, 1, 32>}, {transform_indices = @transform_8, window_bounds = array<i64: 1, 1, 32>}, {transform_indices = @transform_9, window_bounds = array<i64: 1, 1, 32>}, {transform_indices = @transform_10, window_bounds = array<i64: 1, 32, 128>}, {transform_indices = @transform_11, window_bounds = array<i64: 1, 1, 128>}, {transform_indices = @transform_12, window_bounds = array<i64: 1, 128, 32>}, {transform_indices = @transform_13, window_bounds = array<i64: 1, 1, 32>}, {transform_indices = @transform_14, window_bounds = array<i64: 1, 8, 32>}]} {
    %c0_i32 = arith.constant 0 : i32
    %0 = arith.cmpi eq, %arg1, %c0_i32 : i32
    %1 = arith.extui %0 : i1 to i32
    %c0_i32_0 = arith.constant 0 : i32
    %2 = arith.cmpi ne, %1, %c0_i32_0 : i32
    scf.if %2 {
      %c0_66 = arith.constant 0 : index
      %c0_67 = arith.constant 0 : index
      %c0_68 = arith.constant 0 : index
      %121 = vector.load %arg2[%c0_66, %c0_67, %c0_68] : memref<1x8x32xf32, #tpu.memory_space<vmem>>, vector<1x8x32xf32>
      %c0_69 = arith.constant 0 : index
      %c0_70 = arith.constant 0 : index
      %c0_71 = arith.constant 0 : index
      %122 = vector.load %arg16[%c0_69, %c0_70, %c0_71] : memref<1x8x32xf32, #tpu.memory_space<vmem>>, vector<1x8x32xf32>
      tpu.vector_store %arg16[%c0_69, %c0_70, %c0_71], %121 {strides = array<i32>} : memref<1x8x32xf32, #tpu.memory_space<vmem>>, vector<1x8x32xf32>,
    } else {
    }
    %c0 = arith.constant 0 : index
    %c0_1 = arith.constant 0 : index
    %c0_2 = arith.constant 0 : index
    %3 = vector.load %arg16[%c0, %c0_1, %c0_2] : memref<1x8x32xf32, #tpu.memory_space<vmem>>, vector<1x8x32xf32>
    %4 = vector.shape_cast %3 : vector<1x8x32xf32> to vector<8x32xf32>
    %c0_3 = arith.constant 0 : index
    %c0_4 = arith.constant 0 : index
    %c0_5 = arith.constant 0 : index
    %5 = vector.load %arg4[%c0_3, %c0_4, %c0_5] : memref<1x1x32xf32, #tpu.memory_space<vmem>>, vector<1x1x32xf32>
    %6 = vector.shape_cast %5 : vector<1x1x32xf32> to vector<1x32xf32>
    %c0_6 = arith.constant 0 : index
    %c0_7 = arith.constant 0 : index
    %c0_8 = arith.constant 0 : index
    %7 = vector.load %arg5[%c0_6, %c0_7, %c0_8] : memref<1x1x32xf32, #tpu.memory_space<vmem>>, vector<1x1x32xf32>
    %8 = vector.shape_cast %7 : vector<1x1x32xf32> to vector<1x32xf32>
    %cst = arith.constant dense<0.000000e+00> : vector<8xf32>
    %9 = vector.multi_reduction <add>, %4, %cst [1] : vector<8x32xf32> to vector<8xf32>
    %10 = vector.shape_cast %9 : vector<8xf32> to vector<8x1xf32>
    %cst_9 = arith.constant 3.200000e+01 : f32
    %11 = vector.broadcast %cst_9 : f32 to vector<8x1xf32>
    %12 = arith.divf %10, %11 : vector<8x1xf32>
    %13 = vector.broadcast %12 : vector<8x1xf32> to vector<8x32xf32>
    %14 = arith.subf %4, %13 : vector<8x32xf32>
    %15 = arith.mulf %14, %14 : vector<8x32xf32>
    %cst_10 = arith.constant dense<0.000000e+00> : vector<8xf32>
    %16 = vector.multi_reduction <add>, %15, %cst_10 [1] : vector<8x32xf32> to vector<8xf32>
    %17 = vector.shape_cast %16 : vector<8xf32> to vector<8x1xf32>
    %cst_11 = arith.constant 3.200000e+01 : f32
    %18 = vector.broadcast %cst_11 : f32 to vector<8x1xf32>
    %19 = arith.divf %17, %18 : vector<8x1xf32>
    %20 = vector.broadcast %12 : vector<8x1xf32> to vector<8x32xf32>
    %21 = arith.subf %4, %20 : vector<8x32xf32>
    %cst_12 = arith.constant 9.99999974E-6 : f32
    %22 = vector.broadcast %cst_12 : f32 to vector<8x1xf32>
    %23 = arith.addf %19, %22 : vector<8x1xf32>
    %24 = math.rsqrt %23 : vector<8x1xf32>
    %25 = vector.broadcast %24 : vector<8x1xf32> to vector<8x32xf32>
    %26 = arith.mulf %21, %25 : vector<8x32xf32>
    %27 = vector.broadcast %6 : vector<1x32xf32> to vector<8x32xf32>
    %28 = arith.mulf %26, %27 : vector<8x32xf32>
    %29 = vector.broadcast %8 : vector<1x32xf32> to vector<8x32xf32>
    %30 = arith.addf %28, %29 : vector<8x32xf32>
    %c0_13 = arith.constant 0 : index
    %c0_14 = arith.constant 0 : index
    %c0_15 = arith.constant 0 : index
    %31 = vector.load %arg6[%c0_13, %c0_14, %c0_15] : memref<1x96x32xf32, #tpu.memory_space<vmem>>, vector<1x96x32xf32>
    %32 = vector.shape_cast %31 : vector<1x96x32xf32> to vector<96x32xf32>
    %cst_16 = arith.constant dense<0.000000e+00> : vector<96x8xf32>
    %33 = tpu.matmul %32, %30, %cst_16 {dimension_numbers = #tpu.dot_dimension_numbers<[1], [1], [0], [0], [0, 0, 1, 0], [], []>} : vector<96x32xf32>, vector<8x32xf32>, vector<96x8xf32> -> vector<96x8xf32>
    %c0_17 = arith.constant 0 : index
    %c0_18 = arith.constant 0 : index
    %c0_19 = arith.constant 0 : index
    %34 = vector.load %arg7[%c0_17, %c0_18, %c0_19] : memref<1x96x1xf32, #tpu.memory_space<vmem>>, vector<1x96x1xf32>
    %35 = vector.shape_cast %34 : vector<1x96x1xf32> to vector<96x1xf32>
    %36 = vector.broadcast %35 : vector<96x1xf32> to vector<96x8xf32>
    %37 = arith.addf %33, %36 : vector<96x8xf32>
    %38 = vector.shape_cast %37 : vector<96x8xf32> to vector<12x8x8xf32>
    %39 = vector.extract_strided_slice %38 {offsets = [0, 0, 0], sizes = [4, 8, 8], strides = [1, 1, 1]} : vector<12x8x8xf32> to vector<4x8x8xf32>
    %cst_20 = arith.constant 0.353553385 : f32
    %40 = vector.broadcast %cst_20 : f32 to vector<4x8x8xf32>
    %41 = arith.mulf %39, %40 : vector<4x8x8xf32>
    %42 = vector.extract_strided_slice %38 {offsets = [4, 0, 0], sizes = [4, 8, 8], strides = [1, 1, 1]} : vector<12x8x8xf32> to vector<4x8x8xf32>
    %43 = vector.extract_strided_slice %38 {offsets = [8, 0, 0], sizes = [4, 8, 8], strides = [1, 1, 1]} : vector<12x8x8xf32> to vector<4x8x8xf32>
    %cst_21 = arith.constant dense<0.000000e+00> : vector<4x8x8xf32>
    %44 = tpu.matmul %41, %42, %cst_21 {dimension_numbers = #tpu.dot_dimension_numbers<[1], [1], [2], [2], [0, 0, 0, 2, 1, 2], [0], [0]>} : vector<4x8x8xf32>, vector<4x8x8xf32>, vector<4x8x8xf32> -> vector<4x8x8xf32>
    %c0_22 = arith.constant 0 : index
    %c0_23 = arith.constant 0 : index
    %45 = vector.load %arg3[%c0_22, %c0_23] : memref<8x8xf32, #tpu.memory_space<vmem>>, vector<8x8xf32>
    %46 = vector.shape_cast %45 : vector<8x8xf32> to vector<1x8x8xf32>
    %47 = vector.broadcast %46 : vector<1x8x8xf32> to vector<4x8x8xf32>
    %48 = arith.addf %44, %47 : vector<4x8x8xf32>
    %cst_24 = arith.constant dense<0xFF800000> : vector<4x8xf32>
    %49 = vector.multi_reduction <maximumf>, %48, %cst_24 [2] : vector<4x8x8xf32> to vector<4x8xf32>
    %50 = vector.shape_cast %49 : vector<4x8xf32> to vector<4x8x1xf32>
    %51 = vector.broadcast %50 : vector<4x8x1xf32> to vector<4x8x8xf32>
    %52 = arith.subf %48, %51 : vector<4x8x8xf32>
    %53 = math.exp %52 : vector<4x8x8xf32>
    %cst_25 = arith.constant dense<0.000000e+00> : vector<4x8xf32>
    %54 = vector.multi_reduction <add>, %53, %cst_25 [2] : vector<4x8x8xf32> to vector<4x8xf32>
    %55 = vector.shape_cast %54 : vector<4x8xf32> to vector<4x8x1xf32>
    %56 = tpu.reciprocal %55 {approx = true} : vector<4x8x1xf32> -> vector<4x8x1xf32>
    %57 = vector.broadcast %56 : vector<4x8x1xf32> to vector<4x8x8xf32>
    %58 = arith.mulf %53, %57 : vector<4x8x8xf32>
    %cst_26 = arith.constant dense<0.000000e+00> : vector<4x8x8xf32>
    %59 = tpu.matmul %58, %43, %cst_26 {dimension_numbers = #tpu.dot_dimension_numbers<[2], [2], [1], [1], [0, 0, 0, 1, 1, 1], [0], [0]>} : vector<4x8x8xf32>, vector<4x8x8xf32>, vector<4x8x8xf32> -> vector<4x8x8xf32>
    %c0_27 = arith.constant 0 : index
    %c0_28 = arith.constant 0 : index
    %c0_29 = arith.constant 0 : index
    %c0_30 = arith.constant 0 : index
    %60 = vector.load %arg8[%c0_27, %c0_28, %c0_29, %c0_30] : memref<1x4x8x32xf32, #tpu.memory_space<vmem>>, vector<1x4x8x32xf32>
    %61 = vector.shape_cast %60 : vector<1x4x8x32xf32> to vector<4x8x32xf32>
    %cst_31 = arith.constant dense<0.000000e+00> : vector<4x8x32xf32>
    %62 = tpu.matmul %59, %61, %cst_31 {dimension_numbers = #tpu.dot_dimension_numbers<[2], [1], [1], [2], [0, 0, 0, 1, 1, 2], [0], [0]>} : vector<4x8x8xf32>, vector<4x8x32xf32>, vector<4x8x32xf32> -> vector<4x8x32xf32>
    %cst_32 = arith.constant dense<0.000000e+00> : vector<8x32xf32>
    %63 = vector.multi_reduction <add>, %62, %cst_32 [0] : vector<4x8x32xf32> to vector<8x32xf32>
    %c0_33 = arith.constant 0 : index
    %c0_34 = arith.constant 0 : index
    %c0_35 = arith.constant 0 : index
    %64 = vector.load %arg9[%c0_33, %c0_34, %c0_35] : memref<1x1x32xf32, #tpu.memory_space<vmem>>, vector<1x1x32xf32>
    %65 = vector.shape_cast %64 : vector<1x1x32xf32> to vector<1x32xf32>
    %66 = vector.broadcast %65 : vector<1x32xf32> to vector<8x32xf32>
    %67 = arith.addf %63, %66 : vector<8x32xf32>
    %68 = arith.addf %4, %67 : vector<8x32xf32>
    %c0_36 = arith.constant 0 : index
    %c0_37 = arith.constant 0 : index
    %c0_38 = arith.constant 0 : index
    %69 = vector.load %arg10[%c0_36, %c0_37, %c0_38] : memref<1x1x32xf32, #tpu.memory_space<vmem>>, vector<1x1x32xf32>
    %70 = vector.shape_cast %69 : vector<1x1x32xf32> to vector<1x32xf32>
    %c0_39 = arith.constant 0 : index
    %c0_40 = arith.constant 0 : index
    %c0_41 = arith.constant 0 : index
    %71 = vector.load %arg11[%c0_39, %c0_40, %c0_41] : memref<1x1x32xf32, #tpu.memory_space<vmem>>, vector<1x1x32xf32>
    %72 = vector.shape_cast %71 : vector<1x1x32xf32> to vector<1x32xf32>
    %cst_42 = arith.constant dense<0.000000e+00> : vector<8xf32>
    %73 = vector.multi_reduction <add>, %68, %cst_42 [1] : vector<8x32xf32> to vector<8xf32>
    %74 = vector.shape_cast %73 : vector<8xf32> to vector<8x1xf32>
    %cst_43 = arith.constant 3.200000e+01 : f32
    %75 = vector.broadcast %cst_43 : f32 to vector<8x1xf32>
    %76 = arith.divf %74, %75 : vector<8x1xf32>
    %77 = vector.broadcast %76 : vector<8x1xf32> to vector<8x32xf32>
    %78 = arith.subf %68, %77 : vector<8x32xf32>
    %79 = arith.mulf %78, %78 : vector<8x32xf32>
    %cst_44 = arith.constant dense<0.000000e+00> : vector<8xf32>
    %80 = vector.multi_reduction <add>, %79, %cst_44 [1] : vector<8x32xf32> to vector<8xf32>
    %81 = vector.shape_cast %80 : vector<8xf32> to vector<8x1xf32>
    %cst_45 = arith.constant 3.200000e+01 : f32
    %82 = vector.broadcast %cst_45 : f32 to vector<8x1xf32>
    %83 = arith.divf %81, %82 : vector<8x1xf32>
    %84 = vector.broadcast %76 : vector<8x1xf32> to vector<8x32xf32>
    %85 = arith.subf %68, %84 : vector<8x32xf32>
    %cst_46 = arith.constant 9.99999974E-6 : f32
    %86 = vector.broadcast %cst_46 : f32 to vector<8x1xf32>
    %87 = arith.addf %83, %86 : vector<8x1xf32>
    %88 = math.rsqrt %87 : vector<8x1xf32>
    %89 = vector.broadcast %88 : vector<8x1xf32> to vector<8x32xf32>
    %90 = arith.mulf %85, %89 : vector<8x32xf32>
    %91 = vector.broadcast %70 : vector<1x32xf32> to vector<8x32xf32>
    %92 = arith.mulf %90, %91 : vector<8x32xf32>
    %93 = vector.broadcast %72 : vector<1x32xf32> to vector<8x32xf32>
    %94 = arith.addf %92, %93 : vector<8x32xf32>
    %c0_47 = arith.constant 0 : index
    %c0_48 = arith.constant 0 : index
    %c0_49 = arith.constant 0 : index
    %95 = vector.load %arg12[%c0_47, %c0_48, %c0_49] : memref<1x32x128xf32, #tpu.memory_space<vmem>>, vector<1x32x128xf32>
    %96 = vector.shape_cast %95 : vector<1x32x128xf32> to vector<32x128xf32>
    %cst_50 = arith.constant dense<0.000000e+00> : vector<8x128xf32>
    %97 = tpu.matmul %94, %96, %cst_50 {dimension_numbers = #tpu.dot_dimension_numbers<[1], [0], [0], [1], [0, 0, 1, 1], [], []>} : vector<8x32xf32>, vector<32x128xf32>, vector<8x128xf32> -> vector<8x128xf32>
    %c0_51 = arith.constant 0 : index
    %c0_52 = arith.constant 0 : index
    %c0_53 = arith.constant 0 : index
    %98 = vector.load %arg13[%c0_51, %c0_52, %c0_53] : memref<1x1x128xf32, #tpu.memory_space<vmem>>, vector<1x1x128xf32>
    %99 = vector.shape_cast %98 : vector<1x1x128xf32> to vector<1x128xf32>
    %100 = vector.broadcast %99 : vector<1x128xf32> to vector<8x128xf32>
    %101 = arith.addf %97, %100 : vector<8x128xf32>
    %cst_54 = arith.constant 1.702000e+00 : f32
    %102 = vector.broadcast %cst_54 : f32 to vector<8x128xf32>
    %103 = arith.mulf %102, %101 : vector<8x128xf32>
    %104 = arith.negf %103 : vector<8x128xf32>
    %105 = math.exp %104 : vector<8x128xf32>
    %cst_55 = arith.constant 1.000000e+00 : f32
    %106 = vector.broadcast %cst_55 : f32 to vector<8x128xf32>
    %107 = arith.addf %106, %105 : vector<8x128xf32>
    %108 = arith.divf %106, %107 : vector<8x128xf32>
    %109 = arith.mulf %101, %108 : vector<8x128xf32>
    %c0_56 = arith.constant 0 : index
    %c0_57 = arith.constant 0 : index
    %c0_58 = arith.constant 0 : index
    %110 = vector.load %arg14[%c0_56, %c0_57, %c0_58] : memref<1x128x32xf32, #tpu.memory_space<vmem>>, vector<1x128x32xf32>
    %111 = vector.shape_cast %110 : vector<1x128x32xf32> to vector<128x32xf32>
    %cst_59 = arith.constant dense<0.000000e+00> : vector<8x32xf32>
    %112 = tpu.matmul %109, %111, %cst_59 {dimension_numbers = #tpu.dot_dimension_numbers<[1], [0], [0], [1], [0, 0, 1, 1], [], []>} : vector<8x128xf32>, vector<128x32xf32>, vector<8x32xf32> -> vector<8x32xf32>
    %113 = arith.addf %68, %112 : vector<8x32xf32>
    %c0_60 = arith.constant 0 : index
    %c0_61 = arith.constant 0 : index
    %c0_62 = arith.constant 0 : index
    %114 = vector.load %arg15[%c0_60, %c0_61, %c0_62] : memref<1x1x32xf32, #tpu.memory_space<vmem>>, vector<1x1x32xf32>
    %115 = vector.shape_cast %114 : vector<1x1x32xf32> to vector<1x32xf32>
    %116 = vector.broadcast %115 : vector<1x32xf32> to vector<8x32xf32>
    %117 = arith.addf %113, %116 : vector<8x32xf32>
    %c0_63 = arith.constant 0 : index
    %c0_64 = arith.constant 0 : index
    %c0_65 = arith.constant 0 : index
    %118 = vector.load %arg16[%c0_63, %c0_64, %c0_65] : memref<1x8x32xf32, #tpu.memory_space<vmem>>, vector<1x8x32xf32>
    %119 = vector.shape_cast %118 : vector<1x8x32xf32> to vector<8x32xf32>
    %120 = vector.shape_cast %117 : vector<8x32xf32> to vector<1x8x32xf32>
    tpu.vector_store %arg16[%c0_63, %c0_64, %c0_65], %120 {strides = array<i32>} : memref<1x8x32xf32, #tpu.memory_space<vmem>>, vector<1x8x32xf32>,
    return
  }
  func.func @transform_0(%arg0: i32, %arg1: i32) -> (i32, i32, i32) {
    %c0_i32 = arith.constant 0 : i32
    %c0_i32_0 = arith.constant 0 : i32
    %c0_i32_1 = arith.constant 0 : i32
    return %arg0, %c0_i32, %c0_i32_0 : i32, i32, i32
  }
  func.func @transform_1(%arg0: i32, %arg1: i32) -> (i32, i32) {
    %c0_i32 = arith.constant 0 : i32
    %c0_i32_0 = arith.constant 0 : i32
    %c0_i32_1 = arith.constant 0 : i32
    return %c0_i32, %c0_i32_0 : i32, i32
  }
  func.func @transform_2(%arg0: i32, %arg1: i32) -> (i32, i32, i32) {
    %c0_i32 = arith.constant 0 : i32
    %c0_i32_0 = arith.constant 0 : i32
    %c0_i32_1 = arith.constant 0 : i32
    return %arg1, %c0_i32, %c0_i32_0 : i32, i32, i32
  }
  func.func @transform_3(%arg0: i32, %arg1: i32) -> (i32, i32, i32) {
    %c0_i32 = arith.constant 0 : i32
    %c0_i32_0 = arith.constant 0 : i32
    %c0_i32_1 = arith.constant 0 : i32
    return %arg1, %c0_i32, %c0_i32_0 : i32, i32, i32
  }
  func.func @transform_4(%arg0: i32, %arg1: i32) -> (i32, i32, i32) {
    %c0_i32 = arith.constant 0 : i32
    %c0_i32_0 = arith.constant 0 : i32
    %c0_i32_1 = arith.constant 0 : i32
    return %arg1, %c0_i32, %c0_i32_0 : i32, i32, i32
  }
  func.func @transform_5(%arg0: i32, %arg1: i32) -> (i32, i32, i32) {
    %c0_i32 = arith.constant 0 : i32
    %c0_i32_0 = arith.constant 0 : i32
    %c0_i32_1 = arith.constant 0 : i32
    return %arg1, %c0_i32, %c0_i32_0 : i32, i32, i32
  }
  func.func @transform_6(%arg0: i32, %arg1: i32) -> (i32, i32, i32, i32) {
    %c0_i32 = arith.constant 0 : i32
    %c0_i32_0 = arith.constant 0 : i32
    %c0_i32_1 = arith.constant 0 : i32
    %c0_i32_2 = arith.constant 0 : i32
    return %arg1, %c0_i32, %c0_i32_0, %c0_i32_1 : i32, i32, i32, i32
  }
  func.func @transform_7(%arg0: i32, %arg1: i32) -> (i32, i32, i32) {
    %c0_i32 = arith.constant 0 : i32
    %c0_i32_0 = arith.constant 0 : i32
    %c0_i32_1 = arith.constant 0 : i32
    return %arg1, %c0_i32, %c0_i32_0 : i32, i32, i32
  }
  func.func @transform_8(%arg0: i32, %arg1: i32) -> (i32, i32, i32) {
    %c0_i32 = arith.constant 0 : i32
    %c0_i32_0 = arith.constant 0 : i32
    %c0_i32_1 = arith.constant 0 : i32
    return %arg1, %c0_i32, %c0_i32_0 : i32, i32, i32
  }
  func.func @transform_9(%arg0: i32, %arg1: i32) -> (i32, i32, i32) {
    %c0_i32 = arith.constant 0 : i32
    %c0_i32_0 = arith.constant 0 : i32
    %c0_i32_1 = arith.constant 0 : i32
    return %arg1, %c0_i32, %c0_i32_0 : i32, i32, i32
  }
  func.func @transform_10(%arg0: i32, %arg1: i32) -> (i32, i32, i32) {
    %c0_i32 = arith.constant 0 : i32
    %c0_i32_0 = arith.constant 0 : i32
    %c0_i32_1 = arith.constant 0 : i32
    return %arg1, %c0_i32, %c0_i32_0 : i32, i32, i32
  }
  func.func @transform_11(%arg0: i32, %arg1: i32) -> (i32, i32, i32) {
    %c0_i32 = arith.constant 0 : i32
    %c0_i32_0 = arith.constant 0 : i32
    %c0_i32_1 = arith.constant 0 : i32
    return %arg1, %c0_i32, %c0_i32_0 : i32, i32, i32
  }
  func.func @transform_12(%arg0: i32, %arg1: i32) -> (i32, i32, i32) {
    %c0_i32 = arith.constant 0 : i32
    %c0_i32_0 = arith.constant 0 : i32
    %c0_i32_1 = arith.constant 0 : i32
    return %arg1, %c0_i32, %c0_i32_0 : i32, i32, i32
  }
  func.func @transform_13(%arg0: i32, %arg1: i32) -> (i32, i32, i32) {
    %c0_i32 = arith.constant 0 : i32
    %c0_i32_0 = arith.constant 0 : i32
    %c0_i32_1 = arith.constant 0 : i32
    return %arg1, %c0_i32, %c0_i32_0 : i32, i32, i32
  }
  func.func @transform_14(%arg0: i32, %arg1: i32) -> (i32, i32, i32) {
    %c0_i32 = arith.constant 0 : i32
    %c0_i32_0 = arith.constant 0 : i32
    %c0_i32_1 = arith.constant 0 : i32
    return %arg0, %c0_i32, %c0_i32_0 : i32, i32, i32
  }
}

</mosaic_0001>

<llo_original>
// kernel: _lambda_.1
$region0: #{_lambda_.1}
  #allocation0 [shape = 'u32[]', space=smem, size = 0x4, offset = 0x4, fixed_abs, tag = 'smem constant byte address 0x4 - core index']
  #allocation1 [shape = 'u32[144,128]{1,0:T(1,128)}', space=vmem, size = 0x12000, scoped, tag = 'internal scratch']
  %s0 = inlined_call_operand.hbm [shape: f32[2,8,32], index: 0, kind: input, shape index: {}]
  %s1 = inlined_call_operand.hbm [shape: f32[8,8], index: 1, kind: input, shape index: {}]
  %s2 = inlined_call_operand.hbm [shape: f32[2,1,32], index: 2, kind: input, shape index: {}, may-alias: {2,8}]
  %s3 = inlined_call_operand.hbm [shape: f32[2,1,32], index: 3, kind: input, shape index: {}, may-alias: {3,9}]
  %s4 = inlined_call_operand.hbm [shape: f32[2,96,32], index: 4, kind: input, shape index: {}]
  %s5 = inlined_call_operand.hbm [shape: f32[2,96,1], index: 5, kind: input, shape index: {}]
  %s6 = inlined_call_operand.hbm [shape: f32[2,4,8,32], index: 6, kind: input, shape index: {}]
  %s7 = inlined_call_operand.hbm [shape: f32[2,1,32], index: 7, kind: input, shape index: {}]
  %s8 = inlined_call_operand.hbm [shape: f32[2,1,32], index: 8, kind: input, shape index: {}, may-alias: {2,8}]
  %s9 = inlined_call_operand.hbm [shape: f32[2,1,32], index: 9, kind: input, shape index: {}, may-alias: {3,9}]
  %s10 = inlined_call_operand.hbm [shape: f32[2,32,128], index: 10, kind: input, shape index: {}]
  %s11 = inlined_call_operand.hbm [shape: f32[2,1,128], index: 11, kind: input, shape index: {}]
  %s12 = inlined_call_operand.hbm [shape: f32[2,128,32], index: 12, kind: input, shape index: {}]
  %s13 = inlined_call_operand.hbm [shape: f32[2,1,32], index: 13, kind: input, shape index: {}]
  %s14 = inlined_call_operand.hbm [shape: f32[2,8,32], index: 14, kind: output, shape index: {}]
  %s15 = sld [smem:[#allocation0]]
  $region149: #{_lambda_.1} parent=0
    _
  %s17 = ssub.s32 1, %s15
  %s18 = scalar_select 0, %s17, %s15
  $region1: #{_lambda_.1} parent=0
    #allocation2 [shape = 'u8[8192]{0}', space=vmem, size = 0x2000, scoped, tag = 'input window, operand 0']
    #allocation3 [shape = 's32[2]{0}', space=sflag, size = 0x8, scoped, tag = 'scoped memory for _lambda_.1']
    #allocation4 [shape = 's32[2]{0}', space=sflag, size = 0x8, scoped, tag = 'scoped memory for _lambda_.1']
    #allocation5 [shape = 'u8[4096]{0}', space=vmem, size = 0x1000, scoped, tag = 'input window, operand 1, single buffered']
    #allocation6 [shape = 's32[1]{0}', space=sflag, size = 0x4, scoped, tag = 'scoped memory for _lambda_.1']
    #allocation7 [shape = 'u8[1024]{0}', space=vmem, size = 0x400, scoped, tag = 'input window, operand 2']
    #allocation8 [shape = 'u8[1024]{0}', space=vmem, size = 0x400, scoped, tag = 'input window, operand 3']
    #allocation9 [shape = 'u8[98304]{0}', space=vmem, size = 0x18000, scoped, tag = 'input window, operand 4']
    #allocation10 [shape = 'u8[98304]{0}', space=vmem, size = 0x18000, scoped, tag = 'input window, operand 5']
    #allocation11 [shape = 'u8[32768]{0}', space=vmem, size = 0x8000, scoped, tag = 'input window, operand 6']
    #allocation12 [shape = 'u8[1024]{0}', space=vmem, size = 0x400, scoped, tag = 'input window, operand 7']
    #allocation13 [shape = 'u8[1024]{0}', space=vmem, size = 0x400, scoped, tag = 'input window, operand 8']
    #allocation14 [shape = 'u8[1024]{0}', space=vmem, size = 0x400, scoped, tag = 'input window, operand 9']
    #allocation15 [shape = 'u8[32768]{0}', space=vmem, size = 0x8000, scoped, tag = 'input window, operand 10']
    #allocation16 [shape = 'u8[1024]{0}', space=vmem, size = 0x400, scoped, tag = 'input window, operand 11']
    #allocation17 [shape = 'u8[131072]{0}', space=vmem, size = 0x20000, scoped, tag = 'input window, operand 12']
    #allocation18 [shape = 'u8[1024]{0}', space=vmem, size = 0x400, scoped, tag = 'input window, operand 13']
    #allocation19 [shape = 'u8[8192]{0}', space=vmem, size = 0x2000, scoped, tag = 'output window, operand 0']
    %19 = vsyncpa [#allocation3], 0
    %s20 = scalar_lea.sflag [#allocation3], 1
    %21 = vsyncpa %s20, 0
    %22 = vsyncpa [#allocation6], 0
    %23 = vsyncpa [#allocation4], 0
    %s24 = scalar_lea.sflag [#allocation4], 1
    %25 = vsyncpa %s24, 0
    loop: start=0, step=1, limit=6
    $region2: #{_lambda_.1} parent=1 // loop_pre_header
      _
    $region3: #{_lambda_.1} parent=1 // loop_header
      %s27 = sphi 0, %s31
      %p28 = scmp.ge.s32.totalorder %s27, 6
      %s34 = sphi 0, %s46
      %s35 = sphi 0, %s42
      %s36 = sphi 0, %s34
      %s37 = sphi 0, %s35
      %s38 = sphi 0, %s36
      %s39 = sphi 0, %s37
      %s49 = sphi 0, %s51
      %s52 = sphi 0, %s49
      %s53 = sphi 0, %s52
      %s69 = sphi 0, %s53
      %s73 = sphi 0, %s73
      %s75 = sphi 0, %s73
      %s76 = sphi 0, %s75
      %s90 = sphi 0, %s76
      %s96 = sphi 0, %s98
      %s99 = sphi 0, %s96
      %s100 = sphi 0, %s99
      %s116 = sphi 0, %s100
      %s122 = sphi 0, %s124
      %s125 = sphi 0, %s122
      %s126 = sphi 0, %s125
      %s142 = sphi 0, %s126
      %s148 = sphi 0, %s150
      %s151 = sphi 0, %s148
      %s152 = sphi 0, %s151
      %s168 = sphi 0, %s152
      %s174 = sphi 0, %s176
      %s177 = sphi 0, %s174
      %s178 = sphi 0, %s177
      %s194 = sphi 0, %s178
      %s200 = sphi 0, %s202
      %s203 = sphi 0, %s200
      %s204 = sphi 0, %s203
      %s220 = sphi 0, %s204
      %s226 = sphi 0, %s228
      %s229 = sphi 0, %s226
      %s230 = sphi 0, %s229
      %s246 = sphi 0, %s230
      %s252 = sphi 0, %s254
      %s255 = sphi 0, %s252
      %s256 = sphi 0, %s255
      %s272 = sphi 0, %s256
      %s278 = sphi 0, %s280
      %s281 = sphi 0, %s278
      %s282 = sphi 0, %s281
      %s298 = sphi 0, %s282
      %s304 = sphi 0, %s306
      %s307 = sphi 0, %s304
      %s308 = sphi 0, %s307
      %s324 = sphi 0, %s308
      %s330 = sphi 0, %s332
      %s333 = sphi 0, %s330
      %s334 = sphi 0, %s333
      %s350 = sphi 0, %s334
      %s356 = sphi 0, %s358
      %s359 = sphi 0, %s356
      %s360 = sphi 0, %s359
      %s376 = sphi 0, %s360
      %s382 = sphi 0, %s384
      %s385 = sphi 0, %s382
      %s386 = sphi 0, %s385
      %s402 = sphi 0, %s386
      %s408 = sphi 0, %s410
      %s411 = sphi 0, %s408
      %s412 = sphi 0, %s411
      %s428 = sphi 0, %s412
    $region4: #{_lambda_.1} parent=1 // loop_header_branch
      %30 = sbr.rel (%p28) target = $region8
    $region5: #{_lambda_.1} parent=1 // loop_body
      %s32 = ssub.s32 %s27, 1
      %s33 = ssub.s32 %s27, 2
      %s40 = sadd.s32 1, %s35
      %p41 = scmp.ge.s32.totalorder %s40, 2
      %s42 = scalar_select %p41, 0, %s40
      %s43 = sadd.s32 1, %s34
      %s44 = scalar_select %p41, %s43, %s34
      %p45 = scmp.ge.s32.totalorder %s44, 2
      %s46 = scalar_select %p45, 0, %s44
      %s47 = ssub.s32 %s34, %s46
      %p48 = scmp.eq.s32.totalorder %s47, 0
      %s50 = sadd.s32 %s49, 1
      %s51 = scalar_select %p48, %s49, %s50
      %p54 = pneg %p48
      %p55 = scmp.eq.s32.totalorder %s27, 3
      %p56 = por %p54, %p55
      %p57 = scmp.ne.s32.totalorder %s49, %s52
      %p58 = scmp.eq.s32.totalorder %s27, 0
      %p59 = por %p57, %p58
      %p60 = scmp.ne.s32.totalorder %s49, %s52
      %p61 = scmp.eq.s32.totalorder %s32, 3
      %p62 = por %p60, %p61
      %p63 = scmp.ne.s32.totalorder %s52, %s53
      %p64 = scmp.eq.s32.totalorder %s32, 0
      %p65 = por %p63, %p64
      %p66 = scmp.ne.s32.totalorder %s52, %s53
      %p67 = scmp.eq.s32.totalorder %s33, 3
      %p68 = por %p66, %p67
      %p70 = scmp.ne.s32.totalorder %s53, %s69
      %p71 = scmp.eq.s32.totalorder %s33, 0
      %p72 = por %p70, %p71
      %s74 = sadd.s32 %s73, 1
      %p77 = scmp.eq.s32.totalorder %s27, 3
      %p78 = scmp.ne.s32.totalorder %s73, %s75
      %p79 = scmp.eq.s32.totalorder %s27, 0
      %p80 = por %p78, %p79
      %p81 = scmp.ne.s32.totalorder %s73, %s75
      %p82 = scmp.eq.s32.totalorder %s32, 3
      %p83 = por %p81, %p82
      %p84 = scmp.ne.s32.totalorder %s75, %s76
      %p85 = scmp.eq.s32.totalorder %s32, 0
      %p86 = por %p84, %p85
      %p87 = scmp.ne.s32.totalorder %s75, %s76
      %p88 = scmp.eq.s32.totalorder %s33, 3
      %p89 = por %p87, %p88
      %p91 = scmp.ne.s32.totalorder %s76, %s90
      %p92 = scmp.eq.s32.totalorder %s33, 0
      %p93 = por %p91, %p92
      %s94 = ssub.s32 %s35, %s42
      %p95 = scmp.eq.s32.totalorder %s94, 0
      %s97 = sadd.s32 %s96, 1
      %s98 = scalar_select %p95, %s96, %s97
      %p101 = pneg %p95
      %p102 = scmp.eq.s32.totalorder %s27, 3
      %p103 = por %p101, %p102
      %p104 = scmp.ne.s32.totalorder %s96, %s99
      %p105 = scmp.eq.s32.totalorder %s27, 0
      %p106 = por %p104, %p105
      %p107 = scmp.ne.s32.totalorder %s96, %s99
      %p108 = scmp.eq.s32.totalorder %s32, 3
      %p109 = por %p107, %p108
      %p110 = scmp.ne.s32.totalorder %s99, %s100
      %p111 = scmp.eq.s32.totalorder %s32, 0
      %p112 = por %p110, %p111
      %p113 = scmp.ne.s32.totalorder %s99, %s100
      %p114 = scmp.eq.s32.totalorder %s33, 3
      %p115 = por %p113, %p114
      %p117 = scmp.ne.s32.totalorder %s100, %s116
      %p118 = scmp.eq.s32.totalorder %s33, 0
      %p119 = por %p117, %p118
      %s120 = ssub.s32 %s35, %s42
      %p121 = scmp.eq.s32.totalorder %s120, 0
      %s123 = sadd.s32 %s122, 1
      %s124 = scalar_select %p121, %s122, %s123
      %p127 = pneg %p121
      %p128 = scmp.eq.s32.totalorder %s27, 3
      %p129 = por %p127, %p128
      %p130 = scmp.ne.s32.totalorder %s122, %s125
      %p131 = scmp.eq.s32.totalorder %s27, 0
      %p132 = por %p130, %p131
      %p133 = scmp.ne.s32.totalorder %s122, %s125
      %p134 = scmp.eq.s32.totalorder %s32, 3
      %p135 = por %p133, %p134
      %p136 = scmp.ne.s32.totalorder %s125, %s126
      %p137 = scmp.eq.s32.totalorder %s32, 0
      %p138 = por %p136, %p137
      %p139 = scmp.ne.s32.totalorder %s125, %s126
      %p140 = scmp.eq.s32.totalorder %s33, 3
      %p141 = por %p139, %p140
      %p143 = scmp.ne.s32.totalorder %s126, %s142
      %p144 = scmp.eq.s32.totalorder %s33, 0
      %p145 = por %p143, %p144
      %s146 = ssub.s32 %s35, %s42
      %p147 = scmp.eq.s32.totalorder %s146, 0
      %s149 = sadd.s32 %s148, 1
      %s150 = scalar_select %p147, %s148, %s149
      %p153 = pneg %p147
      %p154 = scmp.eq.s32.totalorder %s27, 3
      %p155 = por %p153, %p154
      %p156 = scmp.ne.s32.totalorder %s148, %s151
      %p157 = scmp.eq.s32.totalorder %s27, 0
      %p158 = por %p156, %p157
      %p159 = scmp.ne.s32.totalorder %s148, %s151
      %p160 = scmp.eq.s32.totalorder %s32, 3
      %p161 = por %p159, %p160
      %p162 = scmp.ne.s32.totalorder %s151, %s152
      %p163 = scmp.eq.s32.totalorder %s32, 0
      %p164 = por %p162, %p163
      %p165 = scmp.ne.s32.totalorder %s151, %s152
      %p166 = scmp.eq.s32.totalorder %s33, 3
      %p167 = por %p165, %p166
      %p169 = scmp.ne.s32.totalorder %s152, %s168
      %p170 = scmp.eq.s32.totalorder %s33, 0
      %p171 = por %p169, %p170
      %s172 = ssub.s32 %s35, %s42
      %p173 = scmp.eq.s32.totalorder %s172, 0
      %s175 = sadd.s32 %s174, 1
      %s176 = scalar_select %p173, %s174, %s175
      %p179 = pneg %p173
      %p180 = scmp.eq.s32.totalorder %s27, 3
      %p181 = por %p179, %p180
      %p182 = scmp.ne.s32.totalorder %s174, %s177
      %p183 = scmp.eq.s32.totalorder %s27, 0
      %p184 = por %p182, %p183
      %p185 = scmp.ne.s32.totalorder %s174, %s177
      %p186 = scmp.eq.s32.totalorder %s32, 3
      %p187 = por %p185, %p186
      %p188 = scmp.ne.s32.totalorder %s177, %s178
      %p189 = scmp.eq.s32.totalorder %s32, 0
      %p190 = por %p188, %p189
      %p191 = scmp.ne.s32.totalorder %s177, %s178
      %p192 = scmp.eq.s32.totalorder %s33, 3
      %p193 = por %p191, %p192
      %p195 = scmp.ne.s32.totalorder %s178, %s194
      %p196 = scmp.eq.s32.totalorder %s33, 0
      %p197 = por %p195, %p196
      %s198 = ssub.s32 %s35, %s42
      %p199 = scmp.eq.s32.totalorder %s198, 0
      %s201 = sadd.s32 %s200, 1
      %s202 = scalar_select %p199, %s200, %s201
      %p205 = pneg %p199
      %p206 = scmp.eq.s32.totalorder %s27, 3
      %p207 = por %p205, %p206
      %p208 = scmp.ne.s32.totalorder %s200, %s203
      %p209 = scmp.eq.s32.totalorder %s27, 0
      %p210 = por %p208, %p209
      %p211 = scmp.ne.s32.totalorder %s200, %s203
      %p212 = scmp.eq.s32.totalorder %s32, 3
      %p213 = por %p211, %p212
      %p214 = scmp.ne.s32.totalorder %s203, %s204
      %p215 = scmp.eq.s32.totalorder %s32, 0
      %p216 = por %p214, %p215
      %p217 = scmp.ne.s32.totalorder %s203, %s204
      %p218 = scmp.eq.s32.totalorder %s33, 3
      %p219 = por %p217, %p218
      %p221 = scmp.ne.s32.totalorder %s204, %s220
      %p222 = scmp.eq.s32.totalorder %s33, 0
      %p223 = por %p221, %p222
      %s224 = ssub.s32 %s35, %s42
      %p225 = scmp.eq.s32.totalorder %s224, 0
      %s227 = sadd.s32 %s226, 1
      %s228 = scalar_select %p225, %s226, %s227
      %p231 = pneg %p225
      %p232 = scmp.eq.s32.totalorder %s27, 3
      %p233 = por %p231, %p232
      %p234 = scmp.ne.s32.totalorder %s226, %s229
      %p235 = scmp.eq.s32.totalorder %s27, 0
      %p236 = por %p234, %p235
      %p237 = scmp.ne.s32.totalorder %s226, %s229
      %p238 = scmp.eq.s32.totalorder %s32, 3
      %p239 = por %p237, %p238
      %p240 = scmp.ne.s32.totalorder %s229, %s230
      %p241 = scmp.eq.s32.totalorder %s32, 0
      %p242 = por %p240, %p241
      %p243 = scmp.ne.s32.totalorder %s229, %s230
      %p244 = scmp.eq.s32.totalorder %s33, 3
      %p245 = por %p243, %p244
      %p247 = scmp.ne.s32.totalorder %s230, %s246
      %p248 = scmp.eq.s32.totalorder %s33, 0
      %p249 = por %p247, %p248
      %s250 = ssub.s32 %s35, %s42
      %p251 = scmp.eq.s32.totalorder %s250, 0
      %s253 = sadd.s32 %s252, 1
      %s254 = scalar_select %p251, %s252, %s253
      %p257 = pneg %p251
      %p258 = scmp.eq.s32.totalorder %s27, 3
      %p259 = por %p257, %p258
      %p260 = scmp.ne.s32.totalorder %s252, %s255
      %p261 = scmp.eq.s32.totalorder %s27, 0
      %p262 = por %p260, %p261
      %p263 = scmp.ne.s32.totalorder %s252, %s255
      %p264 = scmp.eq.s32.totalorder %s32, 3
      %p265 = por %p263, %p264
      %p266 = scmp.ne.s32.totalorder %s255, %s256
      %p267 = scmp.eq.s32.totalorder %s32, 0
      %p268 = por %p266, %p267
      %p269 = scmp.ne.s32.totalorder %s255, %s256
      %p270 = scmp.eq.s32.totalorder %s33, 3
      %p271 = por %p269, %p270
      %p273 = scmp.ne.s32.totalorder %s256, %s272
      %p274 = scmp.eq.s32.totalorder %s33, 0
      %p275 = por %p273, %p274
      %s276 = ssub.s32 %s35, %s42
      %p277 = scmp.eq.s32.totalorder %s276, 0
      %s279 = sadd.s32 %s278, 1
      %s280 = scalar_select %p277, %s278, %s279
      %p283 = pneg %p277
      %p284 = scmp.eq.s32.totalorder %s27, 3
      %p285 = por %p283, %p284
      %p286 = scmp.ne.s32.totalorder %s278, %s281
      %p287 = scmp.eq.s32.totalorder %s27, 0
      %p288 = por %p286, %p287
      %p289 = scmp.ne.s32.totalorder %s278, %s281
      %p290 = scmp.eq.s32.totalorder %s32, 3
      %p291 = por %p289, %p290
      %p292 = scmp.ne.s32.totalorder %s281, %s282
      %p293 = scmp.eq.s32.totalorder %s32, 0
      %p294 = por %p292, %p293
      %p295 = scmp.ne.s32.totalorder %s281, %s282
      %p296 = scmp.eq.s32.totalorder %s33, 3
      %p297 = por %p295, %p296
      %p299 = scmp.ne.s32.totalorder %s282, %s298
      %p300 = scmp.eq.s32.totalorder %s33, 0
      %p301 = por %p299, %p300
      %s302 = ssub.s32 %s35, %s42
      %p303 = scmp.eq.s32.totalorder %s302, 0
      %s305 = sadd.s32 %s304, 1
      %s306 = scalar_select %p303, %s304, %s305
      %p309 = pneg %p303
      %p310 = scmp.eq.s32.totalorder %s27, 3
      %p311 = por %p309, %p310
      %p312 = scmp.ne.s32.totalorder %s304, %s307
      %p313 = scmp.eq.s32.totalorder %s27, 0
      %p314 = por %p312, %p313
      %p315 = scmp.ne.s32.totalorder %s304, %s307
      %p316 = scmp.eq.s32.totalorder %s32, 3
      %p317 = por %p315, %p316
      %p318 = scmp.ne.s32.totalorder %s307, %s308
      %p319 = scmp.eq.s32.totalorder %s32, 0
      %p320 = por %p318, %p319
      %p321 = scmp.ne.s32.totalorder %s307, %s308
      %p322 = scmp.eq.s32.totalorder %s33, 3
      %p323 = por %p321, %p322
      %p325 = scmp.ne.s32.totalorder %s308, %s324
      %p326 = scmp.eq.s32.totalorder %s33, 0
      %p327 = por %p325, %p326
      %s328 = ssub.s32 %s35, %s42
      %p329 = scmp.eq.s32.totalorder %s328, 0
      %s331 = sadd.s32 %s330, 1
      %s332 = scalar_select %p329, %s330, %s331
      %p335 = pneg %p329
      %p336 = scmp.eq.s32.totalorder %s27, 3
      %p337 = por %p335, %p336
      %p338 = scmp.ne.s32.totalorder %s330, %s333
      %p339 = scmp.eq.s32.totalorder %s27, 0
      %p340 = por %p338, %p339
      %p341 = scmp.ne.s32.totalorder %s330, %s333
      %p342 = scmp.eq.s32.totalorder %s32, 3
      %p343 = por %p341, %p342
      %p344 = scmp.ne.s32.totalorder %s333, %s334
      %p345 = scmp.eq.s32.totalorder %s32, 0
      %p346 = por %p344, %p345
      %p347 = scmp.ne.s32.totalorder %s333, %s334
      %p348 = scmp.eq.s32.totalorder %s33, 3
      %p349 = por %p347, %p348
      %p351 = scmp.ne.s32.totalorder %s334, %s350
      %p352 = scmp.eq.s32.totalorder %s33, 0
      %p353 = por %p351, %p352
      %s354 = ssub.s32 %s35, %s42
      %p355 = scmp.eq.s32.totalorder %s354, 0
      %s357 = sadd.s32 %s356, 1
      %s358 = scalar_select %p355, %s356, %s357
      %p361 = pneg %p355
      %p362 = scmp.eq.s32.totalorder %s27, 3
      %p363 = por %p361, %p362
      %p364 = scmp.ne.s32.totalorder %s356, %s359
      %p365 = scmp.eq.s32.totalorder %s27, 0
      %p366 = por %p364, %p365
      %p367 = scmp.ne.s32.totalorder %s356, %s359
      %p368 = scmp.eq.s32.totalorder %s32, 3
      %p369 = por %p367, %p368
      %p370 = scmp.ne.s32.totalorder %s359, %s360
      %p371 = scmp.eq.s32.totalorder %s32, 0
      %p372 = por %p370, %p371
      %p373 = scmp.ne.s32.totalorder %s359, %s360
      %p374 = scmp.eq.s32.totalorder %s33, 3
      %p375 = por %p373, %p374
      %p377 = scmp.ne.s32.totalorder %s360, %s376
      %p378 = scmp.eq.s32.totalorder %s33, 0
      %p379 = por %p377, %p378
      %s380 = ssub.s32 %s35, %s42
      %p381 = scmp.eq.s32.totalorder %s380, 0
      %s383 = sadd.s32 %s382, 1
      %s384 = scalar_select %p381, %s382, %s383
      %p387 = pneg %p381
      %p388 = scmp.eq.s32.totalorder %s27, 3
      %p389 = por %p387, %p388
      %p390 = scmp.ne.s32.totalorder %s382, %s385
      %p391 = scmp.eq.s32.totalorder %s27, 0
      %p392 = por %p390, %p391
      %p393 = scmp.ne.s32.totalorder %s382, %s385
      %p394 = scmp.eq.s32.totalorder %s32, 3
      %p395 = por %p393, %p394
      %p396 = scmp.ne.s32.totalorder %s385, %s386
      %p397 = scmp.eq.s32.totalorder %s32, 0
      %p398 = por %p396, %p397
      %p399 = scmp.ne.s32.totalorder %s385, %s386
      %p400 = scmp.eq.s32.totalorder %s33, 3
      %p401 = por %p399, %p400
      %p403 = scmp.ne.s32.totalorder %s386, %s402
      %p404 = scmp.eq.s32.totalorder %s33, 0
      %p405 = por %p403, %p404
      %s406 = ssub.s32 %s34, %s46
      %p407 = scmp.eq.s32.totalorder %s406, 0
      %s409 = sadd.s32 %s408, 1
      %s410 = scalar_select %p407, %s408, %s409
      %p413 = pneg %p407
      %p414 = scmp.eq.s32.totalorder %s27, 3
      %p415 = por %p413, %p414
      %p416 = scmp.ne.s32.totalorder %s408, %s411
      %p417 = scmp.eq.s32.totalorder %s27, 0
      %p418 = por %p416, %p417
      %p419 = scmp.ne.s32.totalorder %s408, %s411
      %p420 = scmp.eq.s32.totalorder %s32, 3
      %p421 = por %p419, %p420
      %p422 = scmp.ne.s32.totalorder %s411, %s412
      %p423 = scmp.eq.s32.totalorder %s32, 0
      %p424 = por %p422, %p423
      %p425 = scmp.ne.s32.totalorder %s411, %s412
      %p426 = scmp.eq.s32.totalorder %s33, 3
      %p427 = por %p425, %p426
      %p429 = scmp.ne.s32.totalorder %s412, %s428
      %p430 = scmp.eq.s32.totalorder %s33, 0
      %p431 = por %p429, %p430
      %p432 = scmp.le.s32.totalorder 1, %s27
      %p433 = scmp.lt.s32.totalorder %s27, 5
      %p434 = pnand %p432, %p433
      %p435 = pneg %p434
      // Predicated region
      $region9: #{_lambda_.1} parent=5 // pred_check
        _
      $region10: #{_lambda_.1} parent=5 // pred_check_branch
        %437 = sbr.rel (%p434) target = $region12
      $region11: #{_lambda_.1} parent=5 // pred_region
        %s438 = ssub.s32 %s27, 1
        // Predicated region
        $region13: #{_lambda_.1} parent=11 // pred_check
          %p439 = pneg %p86
        $region14: #{_lambda_.1} parent=11 // pred_check_branch
          %441 = sbr.rel (%p439) target = $region16
        $region15: #{_lambda_.1} parent=11 // pred_region
          %s443 = ssub.s32 128, 128
          %444 = vsyncadd [#allocation6], %s443
          %s446 = sshll.u32 [#allocation5], 4
          %s447 = int_to_ptr.vmem [resolvable:$true] %s446
          %449 = dma.hbm_to_vmem [thread:$0]  %s1, 128, %s447, [#allocation6]
        $region16: #{_lambda_.1} parent=11 // pred_fallthru
          _
      $region12: #{_lambda_.1} parent=5 // pred_fallthru
        _
      %p450 = scmp.lt.s32.totalorder %s27, 4
      // Predicated region
      $region17: #{_lambda_.1} parent=5 // pred_check
        %p451 = pneg %p450
      $region18: #{_lambda_.1} parent=5 // pred_check_branch
        %453 = sbr.rel (%p451) target = $region20
      $region19: #{_lambda_.1} parent=5 // pred_region
        // Predicated region
        $region21: #{_lambda_.1} parent=19 // pred_check
          %p454 = pneg %p59
        $region22: #{_lambda_.1} parent=19 // pred_check_branch
          %456 = sbr.rel (%p454) target = $region24
        $region23: #{_lambda_.1} parent=19 // pred_region
          %s457 = sand.u32 %s27, 1
          %s458 = scalar_lea.sflag [#allocation3], %s457
          %s459 = sand.u32 %s49, 1
          %s460 = smul.addr %s459, 8
          %s461 = scalar_lea.vmem [#allocation2], %s460
          %s463 = ssub.s32 128, 128
          %464 = vsyncadd %s458, %s463
          %s465 = smul.addr %s34, 128
          %s466 = scalar_lea.hbm %s0, %s465
          %s468 = sshll.u32 %s461, 4
          %s469 = int_to_ptr.vmem [resolvable:$true] %s468
          %471 = dma.hbm_to_vmem [thread:$0]  %s466, 128, %s469, %s458
        $region24: #{_lambda_.1} parent=19 // pred_fallthru
          _
        // Predicated region
        $region25: #{_lambda_.1} parent=19 // pred_check
          %p472 = pneg %p106
        $region26: #{_lambda_.1} parent=19 // pred_check_branch
          %474 = sbr.rel (%p472) target = $region28
        $region27: #{_lambda_.1} parent=19 // pred_region
          %s475 = sand.u32 %s27, 1
          %s476 = scalar_lea.sflag [#allocation3], %s475
          %s477 = sand.u32 %s96, 1
          %s478 = scalar_lea.vmem [#allocation7], %s477
          %s480 = ssub.s32 16, 16
          %481 = vsyncadd %s476, %s480
          %s482 = smul.addr %s35, 16
          %s483 = scalar_lea.hbm %s2, %s482
          %s485 = sshll.u32 %s478, 4
          %s486 = int_to_ptr.vmem [resolvable:$true] %s485
          %488 = dma.hbm_to_vmem [thread:$0]  %s483, 16, %s486, %s476
        $region28: #{_lambda_.1} parent=19 // pred_fallthru
          _
        // Predicated region
        $region29: #{_lambda_.1} parent=19 // pred_check
          %p489 = pneg %p132
        $region30: #{_lambda_.1} parent=19 // pred_check_branch
          %491 = sbr.rel (%p489) target = $region32
        $region31: #{_lambda_.1} parent=19 // pred_region
          %s492 = sand.u32 %s27, 1
          %s493 = scalar_lea.sflag [#allocation3], %s492
          %s494 = sand.u32 %s122, 1
          %s495 = scalar_lea.vmem [#allocation8], %s494
          %s497 = ssub.s32 16, 16
          %498 = vsyncadd %s493, %s497
          %s499 = smul.addr %s35, 16
          %s500 = scalar_lea.hbm %s3, %s499
          %s502 = sshll.u32 %s495, 4
          %s503 = int_to_ptr.vmem [resolvable:$true] %s502
          %505 = dma.hbm_to_vmem [thread:$0]  %s500, 16, %s503, %s493
        $region32: #{_lambda_.1} parent=19 // pred_fallthru
          _
        // Predicated region
        $region33: #{_lambda_.1} parent=19 // pred_check
          %p506 = pneg %p158
        $region34: #{_lambda_.1} parent=19 // pred_check_branch
          %508 = sbr.rel (%p506) target = $region36
        $region35: #{_lambda_.1} parent=19 // pred_region
          %s509 = sand.u32 %s27, 1
          %s510 = scalar_lea.sflag [#allocation3], %s509
          %s511 = sand.u32 %s148, 1
          %s512 = smul.addr %s511, 96
          %s513 = scalar_lea.vmem [#allocation9], %s512
          %s515 = ssub.s32 1536, 1536
          %516 = vsyncadd %s510, %s515
          %s517 = smul.addr %s35, 12
          %s518 = smul.addr %s517, 128
          %s519 = scalar_lea.hbm %s4, %s518
          %s520 = sshll.u32 %s513, 4
          %s521 = int_to_ptr.vmem [resolvable:$true] %s520
          %526 = dma.hbm_to_vmem [thread:$0]  %s519, 1536, %s521, %s510, 128, 128, 8
        $region36: #{_lambda_.1} parent=19 // pred_fallthru
          _
        // Predicated region
        $region37: #{_lambda_.1} parent=19 // pred_check
          %p527 = pneg %p184
        $region38: #{_lambda_.1} parent=19 // pred_check_branch
          %529 = sbr.rel (%p527) target = $region40
        $region39: #{_lambda_.1} parent=19 // pred_region
          %s530 = sand.u32 %s27, 1
          %s531 = scalar_lea.sflag [#allocation3], %s530
          %s532 = sand.u32 %s174, 1
          %s533 = smul.addr %s532, 96
          %s534 = scalar_lea.vmem [#allocation10], %s533
          %s536 = ssub.s32 1536, 1536
          %537 = vsyncadd %s531, %s536
          %s538 = smul.addr %s35, 12
          %s539 = smul.addr %s538, 128
          %s540 = scalar_lea.hbm %s5, %s539
          %s541 = sshll.u32 %s534, 4
          %s542 = int_to_ptr.vmem [resolvable:$true] %s541
          %547 = dma.hbm_to_vmem [thread:$0]  %s540, 1536, %s542, %s531, 128, 128, 8
        $region40: #{_lambda_.1} parent=19 // pred_fallthru
          _
        // Predicated region
        $region41: #{_lambda_.1} parent=19 // pred_check
          %p548 = pneg %p210
        $region42: #{_lambda_.1} parent=19 // pred_check_branch
          %550 = sbr.rel (%p548) target = $region44
        $region43: #{_lambda_.1} parent=19 // pred_region
          %s551 = sand.u32 %s27, 1
          %s552 = scalar_lea.sflag [#allocation3], %s551
          %s553 = sand.u32 %s200, 1
          %s554 = smul.addr %s553, 32
          %s555 = scalar_lea.vmem [#allocation11], %s554
          %s557 = ssub.s32 512, 512
          %558 = vsyncadd %s552, %s557
          %s559 = smul.addr %s35, 4
          %s560 = smul.addr %s559, 128
          %s561 = scalar_lea.hbm %s6, %s560
          %s562 = sshll.u32 %s555, 4
          %s563 = int_to_ptr.vmem [resolvable:$true] %s562
          %568 = dma.hbm_to_vmem [thread:$0]  %s561, 512, %s563, %s552, 128, 128, 8
        $region44: #{_lambda_.1} parent=19 // pred_fallthru
          _
        // Predicated region
        $region45: #{_lambda_.1} parent=19 // pred_check
          %p569 = pneg %p236
        $region46: #{_lambda_.1} parent=19 // pred_check_branch
          %571 = sbr.rel (%p569) target = $region48
        $region47: #{_lambda_.1} parent=19 // pred_region
          %s572 = sand.u32 %s27, 1
          %s573 = scalar_lea.sflag [#allocation3], %s572
          %s574 = sand.u32 %s226, 1
          %s575 = scalar_lea.vmem [#allocation12], %s574
          %s577 = ssub.s32 16, 16
          %578 = vsyncadd %s573, %s577
          %s579 = smul.addr %s35, 16
          %s580 = scalar_lea.hbm %s7, %s579
          %s582 = sshll.u32 %s575, 4
          %s583 = int_to_ptr.vmem [resolvable:$true] %s582
          %585 = dma.hbm_to_vmem [thread:$0]  %s580, 16, %s583, %s573
        $region48: #{_lambda_.1} parent=19 // pred_fallthru
          _
        // Predicated region
        $region49: #{_lambda_.1} parent=19 // pred_check
          %p586 = pneg %p262
        $region50: #{_lambda_.1} parent=19 // pred_check_branch
          %588 = sbr.rel (%p586) target = $region52
        $region51: #{_lambda_.1} parent=19 // pred_region
          %s589 = sand.u32 %s27, 1
          %s590 = scalar_lea.sflag [#allocation3], %s589
          %s591 = sand.u32 %s252, 1
          %s592 = scalar_lea.vmem [#allocation13], %s591
          %s594 = ssub.s32 16, 16
          %595 = vsyncadd %s590, %s594
          %s596 = smul.addr %s35, 16
          %s597 = scalar_lea.hbm %s8, %s596
          %s599 = sshll.u32 %s592, 4
          %s600 = int_to_ptr.vmem [resolvable:$true] %s599
          %602 = dma.hbm_to_vmem [thread:$0]  %s597, 16, %s600, %s590
        $region52: #{_lambda_.1} parent=19 // pred_fallthru
          _
        // Predicated region
        $region53: #{_lambda_.1} parent=19 // pred_check
          %p603 = pneg %p288
        $region54: #{_lambda_.1} parent=19 // pred_check_branch
          %605 = sbr.rel (%p603) target = $region56
        $region55: #{_lambda_.1} parent=19 // pred_region
          %s606 = sand.u32 %s27, 1
          %s607 = scalar_lea.sflag [#allocation3], %s606
          %s608 = sand.u32 %s278, 1
          %s609 = scalar_lea.vmem [#allocation14], %s608
          %s611 = ssub.s32 16, 16
          %612 = vsyncadd %s607, %s611
          %s613 = smul.addr %s35, 16
          %s614 = scalar_lea.hbm %s9, %s613
          %s616 = sshll.u32 %s609, 4
          %s617 = int_to_ptr.vmem [resolvable:$true] %s616
          %619 = dma.hbm_to_vmem [thread:$0]  %s614, 16, %s617, %s607
        $region56: #{_lambda_.1} parent=19 // pred_fallthru
          _
        // Predicated region
        $region57: #{_lambda_.1} parent=19 // pred_check
          %p620 = pneg %p314
        $region58: #{_lambda_.1} parent=19 // pred_check_branch
          %622 = sbr.rel (%p620) target = $region60
        $region59: #{_lambda_.1} parent=19 // pred_region
          %s623 = sand.u32 %s27, 1
          %s624 = scalar_lea.sflag [#allocation3], %s623
          %s625 = sand.u32 %s304, 1
          %s626 = smul.addr %s625, 32
          %s627 = scalar_lea.vmem [#allocation15], %s626
          %s629 = ssub.s32 512, 512
          %630 = vsyncadd %s624, %s629
          %s631 = smul.addr %s35, 4
          %s632 = smul.addr %s631, 128
          %s633 = scalar_lea.hbm %s10, %s632
          %s634 = sshll.u32 %s627, 4
          %s635 = int_to_ptr.vmem [resolvable:$true] %s634
          %640 = dma.hbm_to_vmem [thread:$0]  %s633, 512, %s635, %s624, 128, 128, 8
        $region60: #{_lambda_.1} parent=19 // pred_fallthru
          _
        // Predicated region
        $region61: #{_lambda_.1} parent=19 // pred_check
          %p641 = pneg %p340
        $region62: #{_lambda_.1} parent=19 // pred_check_branch
          %643 = sbr.rel (%p641) target = $region64
        $region63: #{_lambda_.1} parent=19 // pred_region
          %s644 = sand.u32 %s27, 1
          %s645 = scalar_lea.sflag [#allocation3], %s644
          %s646 = sand.u32 %s330, 1
          %s647 = scalar_lea.vmem [#allocation16], %s646
          %s649 = ssub.s32 16, 16
          %650 = vsyncadd %s645, %s649
          %s651 = smul.addr %s35, 16
          %s652 = scalar_lea.hbm %s11, %s651
          %s654 = sshll.u32 %s647, 4
          %s655 = int_to_ptr.vmem [resolvable:$true] %s654
          %657 = dma.hbm_to_vmem [thread:$0]  %s652, 16, %s655, %s645
        $region64: #{_lambda_.1} parent=19 // pred_fallthru
          _
        // Predicated region
        $region65: #{_lambda_.1} parent=19 // pred_check
          %p658 = pneg %p366
        $region66: #{_lambda_.1} parent=19 // pred_check_branch
          %660 = sbr.rel (%p658) target = $region68
        $region67: #{_lambda_.1} parent=19 // pred_region
          %s661 = sand.u32 %s27, 1
          %s662 = scalar_lea.sflag [#allocation3], %s661
          %s663 = sand.u32 %s356, 1
          %s664 = smul.addr %s663, 128
          %s665 = scalar_lea.vmem [#allocation17], %s664
          %s667 = ssub.s32 2048, 2048
          %668 = vsyncadd %s662, %s667
          %s669 = smul.addr %s35, 16
          %s670 = smul.addr %s669, 128
          %s671 = scalar_lea.hbm %s12, %s670
          %s672 = sshll.u32 %s665, 4
          %s673 = int_to_ptr.vmem [resolvable:$true] %s672
          %678 = dma.hbm_to_vmem [thread:$0]  %s671, 2048, %s673, %s662, 128, 128, 8
        $region68: #{_lambda_.1} parent=19 // pred_fallthru
          _
        // Predicated region
        $region69: #{_lambda_.1} parent=19 // pred_check
          %p679 = pneg %p392
        $region70: #{_lambda_.1} parent=19 // pred_check_branch
          %681 = sbr.rel (%p679) target = $region72
        $region71: #{_lambda_.1} parent=19 // pred_region
          %s682 = sand.u32 %s27, 1
          %s683 = scalar_lea.sflag [#allocation3], %s682
          %s684 = sand.u32 %s382, 1
          %s685 = scalar_lea.vmem [#allocation18], %s684
          %s687 = ssub.s32 16, 16
          %688 = vsyncadd %s683, %s687
          %s689 = smul.addr %s35, 16
          %s690 = scalar_lea.hbm %s13, %s689
          %s692 = sshll.u32 %s685, 4
          %s693 = int_to_ptr.vmem [resolvable:$true] %s692
          %695 = dma.hbm_to_vmem [thread:$0]  %s690, 16, %s693, %s683
        $region72: #{_lambda_.1} parent=19 // pred_fallthru
          _
      $region20: #{_lambda_.1} parent=5 // pred_fallthru
        _
      %p696 = scmp.le.s32.totalorder 1, %s27
      %p697 = scmp.lt.s32.totalorder %s27, 5
      %p698 = pnand %p696, %p697
      %p699 = pneg %p698
      // Predicated region
      $region73: #{_lambda_.1} parent=5 // pred_check
        _
      $region74: #{_lambda_.1} parent=5 // pred_check_branch
        %701 = sbr.rel (%p698) target = $region76
      $region75: #{_lambda_.1} parent=5 // pred_region
        %s702 = ssub.s32 %s27, 1
        %s703 = sand.u32 %s32, 1
        %s704 = scalar_lea.sflag [#allocation3], %s703
        %s705 = sand.u32 %s52, 1
        %s706 = smul.addr %s705, 8
        %s707 = scalar_lea.vmem [#allocation2], %s706
        // Predicated region
        $region77: #{_lambda_.1} parent=75 // pred_check
          %p708 = pneg %p65
        $region78: #{_lambda_.1} parent=75 // pred_check_branch
          %710 = sbr.rel (%p708) target = $region80
        $region79: #{_lambda_.1} parent=75 // pred_region
          %711 = dma.done %s704, 128
        $region80: #{_lambda_.1} parent=75 // pred_fallthru
          _
        // Predicated region
        $region81: #{_lambda_.1} parent=75 // pred_check
          %p712 = pneg %p86
        $region82: #{_lambda_.1} parent=75 // pred_check_branch
          %714 = sbr.rel (%p712) target = $region84
        $region83: #{_lambda_.1} parent=75 // pred_region
          %715 = dma.done [#allocation6], 128
        $region84: #{_lambda_.1} parent=75 // pred_fallthru
          _
        %s716 = sand.u32 %s32, 1
        %s717 = scalar_lea.sflag [#allocation3], %s716
        %s718 = sand.u32 %s99, 1
        %s719 = scalar_lea.vmem [#allocation7], %s718
        // Predicated region
        $region85: #{_lambda_.1} parent=75 // pred_check
          %p720 = pneg %p112
        $region86: #{_lambda_.1} parent=75 // pred_check_branch
          %722 = sbr.rel (%p720) target = $region88
        $region87: #{_lambda_.1} parent=75 // pred_region
          %723 = dma.done %s717, 16
        $region88: #{_lambda_.1} parent=75 // pred_fallthru
          _
        %s724 = sand.u32 %s32, 1
        %s725 = scalar_lea.sflag [#allocation3], %s724
        %s726 = sand.u32 %s125, 1
        %s727 = scalar_lea.vmem [#allocation8], %s726
        // Predicated region
        $region89: #{_lambda_.1} parent=75 // pred_check
          %p728 = pneg %p138
        $region90: #{_lambda_.1} parent=75 // pred_check_branch
          %730 = sbr.rel (%p728) target = $region92
        $region91: #{_lambda_.1} parent=75 // pred_region
          %731 = dma.done %s725, 16
        $region92: #{_lambda_.1} parent=75 // pred_fallthru
          _
        %s732 = sand.u32 %s32, 1
        %s733 = scalar_lea.sflag [#allocation3], %s732
        %s734 = sand.u32 %s151, 1
        %s735 = smul.addr %s734, 96
        %s736 = scalar_lea.vmem [#allocation9], %s735
        // Predicated region
        $region93: #{_lambda_.1} parent=75 // pred_check
          %p737 = pneg %p164
        $region94: #{_lambda_.1} parent=75 // pred_check_branch
          %739 = sbr.rel (%p737) target = $region96
        $region95: #{_lambda_.1} parent=75 // pred_region
          %740 = dma.done %s733, 1536
        $region96: #{_lambda_.1} parent=75 // pred_fallthru
          _
        %s741 = sand.u32 %s32, 1
        %s742 = scalar_lea.sflag [#allocation3], %s741
        %s743 = sand.u32 %s177, 1
        %s744 = smul.addr %s743, 96
        %s745 = scalar_lea.vmem [#allocation10], %s744
        // Predicated region
        $region97: #{_lambda_.1} parent=75 // pred_check
          %p746 = pneg %p190
        $region98: #{_lambda_.1} parent=75 // pred_check_branch
          %748 = sbr.rel (%p746) target = $region100
        $region99: #{_lambda_.1} parent=75 // pred_region
          %749 = dma.done %s742, 1536
        $region100: #{_lambda_.1} parent=75 // pred_fallthru
          _
        %s750 = sand.u32 %s32, 1
        %s751 = scalar_lea.sflag [#allocation3], %s750
        %s752 = sand.u32 %s203, 1
        %s753 = smul.addr %s752, 32
        %s754 = scalar_lea.vmem [#allocation11], %s753
        // Predicated region
        $region101: #{_lambda_.1} parent=75 // pred_check
          %p755 = pneg %p216
        $region102: #{_lambda_.1} parent=75 // pred_check_branch
          %757 = sbr.rel (%p755) target = $region104
        $region103: #{_lambda_.1} parent=75 // pred_region
          %758 = dma.done %s751, 512
        $region104: #{_lambda_.1} parent=75 // pred_fallthru
          _
        %s759 = sand.u32 %s32, 1
        %s760 = scalar_lea.sflag [#allocation3], %s759
        %s761 = sand.u32 %s229, 1
        %s762 = scalar_lea.vmem [#allocation12], %s761
        // Predicated region
        $region105: #{_lambda_.1} parent=75 // pred_check
          %p763 = pneg %p242
        $region106: #{_lambda_.1} parent=75 // pred_check_branch
          %765 = sbr.rel (%p763) target = $region108
        $region107: #{_lambda_.1} parent=75 // pred_region
          %766 = dma.done %s760, 16
        $region108: #{_lambda_.1} parent=75 // pred_fallthru
          _
        %s767 = sand.u32 %s32, 1
        %s768 = scalar_lea.sflag [#allocation3], %s767
        %s769 = sand.u32 %s255, 1
        %s770 = scalar_lea.vmem [#allocation13], %s769
        // Predicated region
        $region109: #{_lambda_.1} parent=75 // pred_check
          %p771 = pneg %p268
        $region110: #{_lambda_.1} parent=75 // pred_check_branch
          %773 = sbr.rel (%p771) target = $region112
        $region111: #{_lambda_.1} parent=75 // pred_region
          %774 = dma.done %s768, 16
        $region112: #{_lambda_.1} parent=75 // pred_fallthru
          _
        %s775 = sand.u32 %s32, 1
        %s776 = scalar_lea.sflag [#allocation3], %s775
        %s777 = sand.u32 %s281, 1
        %s778 = scalar_lea.vmem [#allocation14], %s777
        // Predicated region
        $region113: #{_lambda_.1} parent=75 // pred_check
          %p779 = pneg %p294
        $region114: #{_lambda_.1} parent=75 // pred_check_branch
          %781 = sbr.rel (%p779) target = $region116
        $region115: #{_lambda_.1} parent=75 // pred_region
          %782 = dma.done %s776, 16
        $region116: #{_lambda_.1} parent=75 // pred_fallthru
          _
        %s783 = sand.u32 %s32, 1
        %s784 = scalar_lea.sflag [#allocation3], %s783
        %s785 = sand.u32 %s307, 1
        %s786 = smul.addr %s785, 32
        %s787 = scalar_lea.vmem [#allocation15], %s786
        // Predicated region
        $region117: #{_lambda_.1} parent=75 // pred_check
          %p788 = pneg %p320
        $region118: #{_lambda_.1} parent=75 // pred_check_branch
          %790 = sbr.rel (%p788) target = $region120
        $region119: #{_lambda_.1} parent=75 // pred_region
          %791 = dma.done %s784, 512
        $region120: #{_lambda_.1} parent=75 // pred_fallthru
          _
        %s792 = sand.u32 %s32, 1
        %s793 = scalar_lea.sflag [#allocation3], %s792
        %s794 = sand.u32 %s333, 1
        %s795 = scalar_lea.vmem [#allocation16], %s794
        // Predicated region
        $region121: #{_lambda_.1} parent=75 // pred_check
          %p796 = pneg %p346
        $region122: #{_lambda_.1} parent=75 // pred_check_branch
          %798 = sbr.rel (%p796) target = $region124
        $region123: #{_lambda_.1} parent=75 // pred_region
          %799 = dma.done %s793, 16
        $region124: #{_lambda_.1} parent=75 // pred_fallthru
          _
        %s800 = sand.u32 %s32, 1
        %s801 = scalar_lea.sflag [#allocation3], %s800
        %s802 = sand.u32 %s359, 1
        %s803 = smul.addr %s802, 128
        %s804 = scalar_lea.vmem [#allocation17], %s803
        // Predicated region
        $region125: #{_lambda_.1} parent=75 // pred_check
          %p805 = pneg %p372
        $region126: #{_lambda_.1} parent=75 // pred_check_branch
          %807 = sbr.rel (%p805) target = $region128
        $region127: #{_lambda_.1} parent=75 // pred_region
          %808 = dma.done %s801, 2048
        $region128: #{_lambda_.1} parent=75 // pred_fallthru
          _
        %s809 = sand.u32 %s32, 1
        %s810 = scalar_lea.sflag [#allocation3], %s809
        %s811 = sand.u32 %s385, 1
        %s812 = scalar_lea.vmem [#allocation18], %s811
        // Predicated region
        $region129: #{_lambda_.1} parent=75 // pred_check
          %p813 = pneg %p398
        $region130: #{_lambda_.1} parent=75 // pred_check_branch
          %815 = sbr.rel (%p813) target = $region132
        $region131: #{_lambda_.1} parent=75 // pred_region
          %816 = dma.done %s810, 16
        $region132: #{_lambda_.1} parent=75 // pred_fallthru
          _
        %s817 = sand.u32 %s32, 1
        %s818 = scalar_lea.sflag [#allocation3], %s817
        %s819 = sand.u32 %s52, 1
        %s820 = smul.addr %s819, 8
        %s821 = scalar_lea.vmem [#allocation2], %s820
        %p822 = pneg %p65
        %p823 = pneg %p62
        %p824 = pneg %p86
        %p825 = pneg %p83
        %s826 = sand.u32 %s32, 1
        %s827 = scalar_lea.sflag [#allocation3], %s826
        %s828 = sand.u32 %s99, 1
        %s829 = scalar_lea.vmem [#allocation7], %s828
        %p830 = pneg %p112
        %p831 = pneg %p109
        %s832 = sand.u32 %s32, 1
        %s833 = scalar_lea.sflag [#allocation3], %s832
        %s834 = sand.u32 %s125, 1
        %s835 = scalar_lea.vmem [#allocation8], %s834
        %p836 = pneg %p138
        %p837 = pneg %p135
        %s838 = sand.u32 %s32, 1
        %s839 = scalar_lea.sflag [#allocation3], %s838
        %s840 = sand.u32 %s151, 1
        %s841 = smul.addr %s840, 96
        %s842 = scalar_lea.vmem [#allocation9], %s841
        %p843 = pneg %p164
        %p844 = pneg %p161
        %s845 = sand.u32 %s32, 1
        %s846 = scalar_lea.sflag [#allocation3], %s845
        %s847 = sand.u32 %s177, 1
        %s848 = smul.addr %s847, 96
        %s849 = scalar_lea.vmem [#allocation10], %s848
        %p850 = pneg %p190
        %p851 = pneg %p187
        %s852 = sand.u32 %s32, 1
        %s853 = scalar_lea.sflag [#allocation3], %s852
        %s854 = sand.u32 %s203, 1
        %s855 = smul.addr %s854, 32
        %s856 = scalar_lea.vmem [#allocation11], %s855
        %p857 = pneg %p216
        %p858 = pneg %p213
        %s859 = sand.u32 %s32, 1
        %s860 = scalar_lea.sflag [#allocation3], %s859
        %s861 = sand.u32 %s229, 1
        %s862 = scalar_lea.vmem [#allocation12], %s861
        %p863 = pneg %p242
        %p864 = pneg %p239
        %s865 = sand.u32 %s32, 1
        %s866 = scalar_lea.sflag [#allocation3], %s865
        %s867 = sand.u32 %s255, 1
        %s868 = scalar_lea.vmem [#allocation13], %s867
        %p869 = pneg %p268
        %p870 = pneg %p265
        %s871 = sand.u32 %s32, 1
        %s872 = scalar_lea.sflag [#allocation3], %s871
        %s873 = sand.u32 %s281, 1
        %s874 = scalar_lea.vmem [#allocation14], %s873
        %p875 = pneg %p294
        %p876 = pneg %p291
        %s877 = sand.u32 %s32, 1
        %s878 = scalar_lea.sflag [#allocation3], %s877
        %s879 = sand.u32 %s307, 1
        %s880 = smul.addr %s879, 32
        %s881 = scalar_lea.vmem [#allocation15], %s880
        %p882 = pneg %p320
        %p883 = pneg %p317
        %s884 = sand.u32 %s32, 1
        %s885 = scalar_lea.sflag [#allocation3], %s884
        %s886 = sand.u32 %s333, 1
        %s887 = scalar_lea.vmem [#allocation16], %s886
        %p888 = pneg %p346
        %p889 = pneg %p343
        %s890 = sand.u32 %s32, 1
        %s891 = scalar_lea.sflag [#allocation3], %s890
        %s892 = sand.u32 %s359, 1
        %s893 = smul.addr %s892, 128
        %s894 = scalar_lea.vmem [#allocation17], %s893
        %p895 = pneg %p372
        %p896 = pneg %p369
        %s897 = sand.u32 %s32, 1
        %s898 = scalar_lea.sflag [#allocation3], %s897
        %s899 = sand.u32 %s385, 1
        %s900 = scalar_lea.vmem [#allocation18], %s899
        %p901 = pneg %p398
        %p902 = pneg %p395
        %p903 = pneg %p424
        %p904 = pneg %p421
        %s905 = sand.u32 %s411, 1
        %s906 = scalar_lea.sflag [#allocation4], %s905
        %s907 = sand.u32 %s411, 1
        %s908 = smul.addr %s907, 8
        %s909 = scalar_lea.vmem [#allocation19], %s908
        %p910 = scmp.eq.s32.totalorder %s37, 0
        // Predicated region
        $region133: #{_lambda_.1} parent=75 // pred_check
          %p911 = pneg %p910
        $region134: #{_lambda_.1} parent=75 // pred_check_branch
          %913 = sbr.rel (%p911) target = $region136
        $region135: #{_lambda_.1} parent=75 // pred_region
          %v914 = vld [vmem:[%s707] sm:$0xff]
          %vm915 = vcmask 261120
          %916 = vst.msk [vmem:[%s909] sm:$0xff] %vm915, %v914
        $region136: #{_lambda_.1} parent=75 // pred_fallthru
          _
        %v917 = vld [vmem:[%s909] sm:$0xff]
        %v918 = vld [vmem:[%s719] sm:$0x1]
        %v919 = vld [vmem:[%s727] sm:$0x1]
        %vm920 = vcmask 261120
        %v921 = vsel %vm920, %v917, 0.0
        %922 = vadd.xlane.f32.xlu0 %v921
        %v923 = vpop.xlane.xlu0 %922
        %v924 = vrcp.pop 32.0
        %v925 = vmul.f32 %v923, %v924
        %v926 = vsub.f32 %v917, %v925
        %v927 = vmul.f32 %v926, %v926
        %v928 = vsel %vm920, %v927, 0.0
        %929 = vadd.xlane.f32.xlu0 %v928
        %v930 = vpop.xlane.xlu0 %929
        %v931 = vmul.f32 %v930, %v924
        %v932 = vadd.f32 %v931, 1e-05
        %v933 = vrsqrt.pop %v932
        %v934 = vmul.f32 %v926, %v933
        %v936 = vlaneseq
        %v937 = vshrl.u32 %v936, 7
        %v938 = vsub.s32 0, %v937
        %v939 = vrot.slane %v918, %v938
        %v941 = vmul.f32 %v934, %v939
        %v943 = vlaneseq
        %v944 = vshrl.u32 %v943, 7
        %v945 = vsub.s32 0, %v944
        %v946 = vrot.slane %v919, %v945
        %v948 = vadd.f32 %v941, %v946
        %v949 = vld [vmem:[%s736] sm:$0xff]
        %v950 = vld [vmem:[%s736 + $0x8] sm:$0xff]
        %v951 = vld [vmem:[%s736 + $0x10] sm:$0xff]
        %v952 = vld [vmem:[%s736 + $0x18] sm:$0xff]
        %v953 = vld [vmem:[%s736 + $0x20] sm:$0xff]
        %v954 = vld [vmem:[%s736 + $0x28] sm:$0xff]
        %v955 = vld [vmem:[%s736 + $0x30] sm:$0xff]
        %v956 = vld [vmem:[%s736 + $0x38] sm:$0xff]
        %v957 = vld [vmem:[%s736 + $0x40] sm:$0xff]
        %v958 = vld [vmem:[%s736 + $0x48] sm:$0xff]
        %v959 = vld [vmem:[%s736 + $0x50] sm:$0xff]
        %v960 = vld [vmem:[%s736 + $0x58] sm:$0xff]
        %v961 = vld [vmem:[%s745] sm:$0xff]
        %v962 = vld [vmem:[%s745 + $0x8] sm:$0xff]
        %v963 = vld [vmem:[%s745 + $0x10] sm:$0xff]
        %v964 = vld [vmem:[%s745 + $0x18] sm:$0xff]
        %v965 = vld [vmem:[%s745 + $0x20] sm:$0xff]
        %v966 = vld [vmem:[%s745 + $0x28] sm:$0xff]
        %v967 = vld [vmem:[%s745 + $0x30] sm:$0xff]
        %v968 = vld [vmem:[%s745 + $0x38] sm:$0xff]
        %v969 = vld [vmem:[%s745 + $0x40] sm:$0xff]
        %v970 = vld [vmem:[%s745 + $0x48] sm:$0xff]
        %v971 = vld [vmem:[%s745 + $0x50] sm:$0xff]
        %v972 = vld [vmem:[%s745 + $0x58] sm:$0xff]
        %974 = vset.pattern.permute.xlu0 0
        %975 = vperm.xlu0 %974, %v961
        %v976 = vpop.permute.xlu0 %975
        %979 = vset.pattern.permute.xlu0 0
        %980 = vperm.xlu0 %979, %v962
        %v981 = vpop.permute.xlu0 %980
        %984 = vset.pattern.permute.xlu0 0
        %985 = vperm.xlu0 %984, %v963
        %v986 = vpop.permute.xlu0 %985
        %989 = vset.pattern.permute.xlu0 0
        %990 = vperm.xlu0 %989, %v964
        %v991 = vpop.permute.xlu0 %990
        %994 = vset.pattern.permute.xlu0 0
        %995 = vperm.xlu0 %994, %v965
        %v996 = vpop.permute.xlu0 %995
        %999 = vset.pattern.permute.xlu0 0
        %1000 = vperm.xlu0 %999, %v966
        %v1001 = vpop.permute.xlu0 %1000
        %1004 = vset.pattern.permute.xlu0 0
        %1005 = vperm.xlu0 %1004, %v967
        %v1006 = vpop.permute.xlu0 %1005
        %1009 = vset.pattern.permute.xlu0 0
        %1010 = vperm.xlu0 %1009, %v968
        %v1011 = vpop.permute.xlu0 %1010
        %1014 = vset.pattern.permute.xlu0 0
        %1015 = vperm.xlu0 %1014, %v969
        %v1016 = vpop.permute.xlu0 %1015
        %1019 = vset.pattern.permute.xlu0 0
        %1020 = vperm.xlu0 %1019, %v970
        %v1021 = vpop.permute.xlu0 %1020
        %1024 = vset.pattern.permute.xlu0 0
        %1025 = vperm.xlu0 %1024, %v971
        %v1026 = vpop.permute.xlu0 %1025
        %1029 = vset.pattern.permute.xlu0 0
        %1030 = vperm.xlu0 %1029, %v972
        %v1031 = vpop.permute.xlu0 %1030
        %v1034 = vsel %vm920, %v949, 0
        %v1037 = vsel %vm920, %v950, 0
        %v1040 = vsel %vm920, %v951, 0
        %v1043 = vsel %vm920, %v952, 0
        %v1046 = vsel %vm920, %v953, 0
        %v1049 = vsel %vm920, %v954, 0
        %v1052 = vsel %vm920, %v955, 0
        %v1055 = vsel %vm920, %v956, 0
        %v1058 = vsel %vm920, %v957, 0
        %v1061 = vsel %vm920, %v958, 0
        %v1064 = vsel %vm920, %v959, 0
        %v1067 = vsel %vm920, %v960, 0
        %v1070 = vsel %vm920, %v948, 0
        %1072 = vmatprep.subr.mxu0 0.0
        %1073 = vmatpush1.xpose.msra.mxu0 %v1070
        %1074 = vmatprep.subr.mxu0 0.0
        %1075 = vmatpush1.xpose.msra.mxu0 0.0
        %1076 = vmatprep.subr.mxu0 0.0
        %1077 = vmatpush1.xpose.msra.mxu0 0.0
        %1078 = vmatprep.subr.mxu0 0.0
        %1079 = vmatpush1.xpose.msra.mxu0 0.0
        %1080 = vmatprep.subr.mxu0 0.0
        %1081 = vmatpush1.xpose.msra.mxu0 0.0
        %1082 = vmatprep.subr.mxu0 0.0
        %1083 = vmatpush1.xpose.msra.mxu0 0.0
        %1084 = vmatprep.subr.mxu0 0.0
        %1085 = vmatpush1.xpose.msra.mxu0 0.0
        %1086 = vmatprep.subr.mxu0 0.0
        %1087 = vmatpush1.xpose.msra.mxu0 0.0
        %1088 = vmatprep.subr.mxu0 0.0
        %1089 = vmatpush1.xpose.msra.mxu0 0.0
        %1090 = vmatprep.subr.mxu0 0.0
        %1091 = vmatpush1.xpose.msra.mxu0 0.0
        %1092 = vmatprep.subr.mxu0 0.0
        %1093 = vmatpush1.xpose.msra.mxu0 0.0
        %1094 = vmatprep.subr.mxu0 0.0
        %1095 = vmatpush1.xpose.msra.mxu0 0.0
        %1096 = vmatprep.subr.mxu0 0.0
        %1097 = vmatpush1.xpose.msra.mxu0 0.0
        %1098 = vmatprep.subr.mxu0 0.0
        %1099 = vmatpush1.xpose.msra.mxu0 0.0
        %1100 = vmatprep.subr.mxu0 0.0
        %1101 = vmatpush1.xpose.msra.mxu0 0.0
        %1102 = vmatprep.subr.mxu0 0.0
        %1103 = vmatpush1.xpose.msra.mxu0 0.0
        %1104 = vmatprep.subr.mxu0 0.0
        %1105 = vmatpush1.xpose.msra.mxu0 0.0
        %1106 = vmatprep.subr.mxu0 0.0
        %1107 = vmatpush1.xpose.msra.mxu0 0.0
        %1108 = vmatprep.subr.mxu0 0.0
        %1109 = vmatpush1.xpose.msra.mxu0 0.0
        %1110 = vmatprep.subr.mxu0 0.0
        %1111 = vmatpush1.xpose.msra.mxu0 0.0
        %1112 = vmatprep.subr.mxu0 0.0
        %1113 = vmatpush1.xpose.msra.mxu0 0.0
        %1114 = vmatprep.subr.mxu0 0.0
        %1115 = vmatpush1.xpose.msra.mxu0 0.0
        %1116 = vmatprep.subr.mxu0 0.0
        %1117 = vmatpush1.xpose.msra.mxu0 0.0
        %1118 = vmatprep.subr.mxu0 0.0
        %1119 = vmatpush1.xpose.msra.mxu0 0.0
        %1120 = vmatprep.subr.mxu0 0.0
        %1121 = vmatpush1.xpose.msra.mxu0 0.0
        %1122 = vmatprep.subr.mxu0 0.0
        %1123 = vmatpush1.xpose.msra.mxu0 0.0
        %1124 = vmatprep.subr.mxu0 0.0
        %1125 = vmatpush1.xpose.msra.mxu0 0.0
        %1126 = vmatprep.subr.mxu0 0.0
        %1127 = vmatpush1.xpose.msra.mxu0 0.0
        %1128 = vmatprep.subr.mxu0 0.0
        %1129 = vmatpush1.xpose.msra.mxu0 0.0
        %1130 = vmatprep.subr.mxu0 0.0
        %1131 = vmatpush1.xpose.msra.mxu0 0.0
        %1132 = vmatprep.subr.mxu0 0.0
        %1133 = vmatpush1.xpose.msra.mxu0 0.0
        %1134 = vmatprep.subr.mxu0 0.0
        %1135 = vmatpush1.xpose.msra.mxu0 0.0
        %1136 = vmatprep.mubr.f32.mxu0 0.0
        %1137 = vmatmul.mubr.f32.gmra.mrb[0].mxu0 %v1034
        %v1138 = vpop.f32.mrb[0].mxu0
        %v1139 = vadd.f32 %v976, %v1138
        %v1140 = vpop.f32.mrb[0].mxu0
        %1141 = vmatprep.mubr.f32.mxu0 0.0
        %1142 = vmatmul.mubr.f32.gmra.mrb[0].mxu0 %v1037
        %v1143 = vpop.f32.mrb[0].mxu0
        %v1144 = vadd.f32 %v981, %v1143
        %v1145 = vpop.f32.mrb[0].mxu0
        %1146 = vmatprep.mubr.f32.mxu0 0.0
        %1147 = vmatmul.mubr.f32.gmra.mrb[0].mxu0 %v1040
        %v1148 = vpop.f32.mrb[0].mxu0
        %v1149 = vadd.f32 %v986, %v1148
        %v1150 = vpop.f32.mrb[0].mxu0
        %1151 = vmatprep.mubr.f32.mxu0 0.0
        %1152 = vmatmul.mubr.f32.gmra.mrb[0].mxu0 %v1043
        %v1153 = vpop.f32.mrb[0].mxu0
        %v1154 = vadd.f32 %v991, %v1153
        %v1155 = vpop.f32.mrb[0].mxu0
        %1156 = vmatprep.mubr.f32.mxu0 0.0
        %1157 = vmatmul.mubr.f32.gmra.mrb[0].mxu0 %v1046
        %v1158 = vpop.f32.mrb[0].mxu0
        %v1159 = vadd.f32 %v996, %v1158
        %v1160 = vpop.f32.mrb[0].mxu0
        %1161 = vmatprep.mubr.f32.mxu0 0.0
        %1162 = vmatmul.mubr.f32.gmra.mrb[0].mxu0 %v1049
        %v1163 = vpop.f32.mrb[0].mxu0
        %v1164 = vadd.f32 %v1001, %v1163
        %v1165 = vpop.f32.mrb[0].mxu0
        %1166 = vmatprep.mubr.f32.mxu0 0.0
        %1167 = vmatmul.mubr.f32.gmra.mrb[0].mxu0 %v1052
        %v1168 = vpop.f32.mrb[0].mxu0
        %v1169 = vadd.f32 %v1006, %v1168
        %v1170 = vpop.f32.mrb[0].mxu0
        %1171 = vmatprep.mubr.f32.mxu0 0.0
        %1172 = vmatmul.mubr.f32.gmra.mrb[0].mxu0 %v1055
        %v1173 = vpop.f32.mrb[0].mxu0
        %v1174 = vadd.f32 %v1011, %v1173
        %v1175 = vpop.f32.mrb[0].mxu0
        %1176 = vmatprep.mubr.f32.mxu0 0.0
        %1177 = vmatmul.mubr.f32.gmra.mrb[0].mxu0 %v1058
        %v1178 = vpop.f32.mrb[0].mxu0
        %v1179 = vadd.f32 %v1016, %v1178
        %v1180 = vpop.f32.mrb[0].mxu0
        %1181 = vmatprep.mubr.f32.mxu0 0.0
        %1182 = vmatmul.mubr.f32.gmra.mrb[0].mxu0 %v1061
        %v1183 = vpop.f32.mrb[0].mxu0
        %v1184 = vadd.f32 %v1021, %v1183
        %v1185 = vpop.f32.mrb[0].mxu0
        %1186 = vmatprep.mubr.f32.mxu0 0.0
        %1187 = vmatmul.mubr.f32.gmra.mrb[0].mxu0 %v1064
        %v1188 = vpop.f32.mrb[0].mxu0
        %v1189 = vadd.f32 %v1026, %v1188
        %v1190 = vpop.f32.mrb[0].mxu0
        %1191 = vmatprep.mubr.f32.mxu0 0.0
        %1192 = vmatmul.mubr.f32.gmra.mrb[0].mxu0 %v1067
        %v1193 = vpop.f32.mrb[0].mxu0
        %v1194 = vadd.f32 %v1031, %v1193
        %v1195 = vpop.f32.mrb[0].mxu0
        %1196 = vdwg.mxu0
        %v1197 = vmul.f32 %v1139, 0.35355338
        %v1198 = vmul.f32 %v1144, 0.35355338
        %v1199 = vmul.f32 %v1149, 0.35355338
        %v1200 = vmul.f32 %v1154, 0.35355338
        %v1201 = vld [vmem:[#allocation5] sm:$0xff]
        %1202 = vxpose.xlu0.b32.start [1/16] %v1197, 128
        %1203 = vxpose.xlu0.b32.cont [2/16] 0.0, 128
        %1204 = vxpose.xlu0.b32.cont [3/16] 0.0, 128
        %1205 = vxpose.xlu0.b32.cont [4/16] 0.0, 128
        %1206 = vxpose.xlu0.b32.cont [5/16] 0.0, 128
        %1207 = vxpose.xlu0.b32.cont [6/16] 0.0, 128
        %1208 = vxpose.xlu0.b32.cont [7/16] 0.0, 128
        %1209 = vxpose.xlu0.b32.cont [8/16] 0.0, 128
        %1210 = vxpose.xlu0.b32.cont [9/16] 0.0, 128
        %1211 = vxpose.xlu0.b32.cont [10/16] 0.0, 128
        %1212 = vxpose.xlu0.b32.cont [11/16] 0.0, 128
        %1213 = vxpose.xlu0.b32.cont [12/16] 0.0, 128
        %1214 = vxpose.xlu0.b32.cont [13/16] 0.0, 128
        %1215 = vxpose.xlu0.b32.cont [14/16] 0.0, 128
        %1216 = vxpose.xlu0.b32.cont [15/16] 0.0, 128
        %1217 = vxpose.xlu0.b32.end [16/16] 0.0, 128
        %v1218 = vpop.trf.xlu0
        %v1219 = vpop.trf.xlu0
        %v1220 = vpop.trf.xlu0
        %v1221 = vpop.trf.xlu0
        %v1222 = vpop.trf.xlu0
        %v1223 = vpop.trf.xlu0
        %v1224 = vpop.trf.xlu0
        %v1225 = vpop.trf.xlu0
        %v1226 = vpop.trf.xlu0
        %v1227 = vpop.trf.xlu0
        %v1228 = vpop.trf.xlu0
        %v1229 = vpop.trf.xlu0
        %v1230 = vpop.trf.xlu0
        %v1231 = vpop.trf.xlu0
        %v1232 = vpop.trf.xlu0
        %v1233 = vpop.trf.xlu0
        %vm1234 = vcmask 64512
        %v1236 = vsel %vm1234, %v1218, 0
        %1238 = vmatprep.subr.mxu0 0.0
        %1239 = vmatpush1.msra.mxu0 %v1159
        %1240 = vmatprep.subr.mxu0 0.0
        %1241 = vmatpush1.msra.mxu0 0.0
        %1242 = vmatprep.subr.mxu0 0.0
        %1243 = vmatpush1.msra.mxu0 0.0
        %1244 = vmatprep.subr.mxu0 0.0
        %1245 = vmatpush1.msra.mxu0 0.0
        %1246 = vmatprep.subr.mxu0 0.0
        %1247 = vmatpush1.msra.mxu0 0.0
        %1248 = vmatprep.subr.mxu0 0.0
        %1249 = vmatpush1.msra.mxu0 0.0
        %1250 = vmatprep.subr.mxu0 0.0
        %1251 = vmatpush1.msra.mxu0 0.0
        %1252 = vmatprep.subr.mxu0 0.0
        %1253 = vmatpush1.msra.mxu0 0.0
        %1254 = vmatprep.subr.mxu0 0.0
        %1255 = vmatpush1.msra.mxu0 0.0
        %1256 = vmatprep.subr.mxu0 0.0
        %1257 = vmatpush1.msra.mxu0 0.0
        %1258 = vmatprep.subr.mxu0 0.0
        %1259 = vmatpush1.msra.mxu0 0.0
        %1260 = vmatprep.subr.mxu0 0.0
        %1261 = vmatpush1.msra.mxu0 0.0
        %1262 = vmatprep.subr.mxu0 0.0
        %1263 = vmatpush1.msra.mxu0 0.0
        %1264 = vmatprep.subr.mxu0 0.0
        %1265 = vmatpush1.msra.mxu0 0.0
        %1266 = vmatprep.subr.mxu0 0.0
        %1267 = vmatpush1.msra.mxu0 0.0
        %1268 = vmatprep.subr.mxu0 0.0
        %1269 = vmatpush1.msra.mxu0 0.0
        %1270 = vmatprep.subr.mxu0 0.0
        %1271 = vmatpush1.msra.mxu0 0.0
        %1272 = vmatprep.subr.mxu0 0.0
        %1273 = vmatpush1.msra.mxu0 0.0
        %1274 = vmatprep.subr.mxu0 0.0
        %1275 = vmatpush1.msra.mxu0 0.0
        %1276 = vmatprep.subr.mxu0 0.0
        %1277 = vmatpush1.msra.mxu0 0.0
        %1278 = vmatprep.subr.mxu0 0.0
        %1279 = vmatpush1.msra.mxu0 0.0
        %1280 = vmatprep.subr.mxu0 0.0
        %1281 = vmatpush1.msra.mxu0 0.0
        %1282 = vmatprep.subr.mxu0 0.0
        %1283 = vmatpush1.msra.mxu0 0.0
        %1284 = vmatprep.subr.mxu0 0.0
        %1285 = vmatpush1.msra.mxu0 0.0
        %1286 = vmatprep.subr.mxu0 0.0
        %1287 = vmatpush1.msra.mxu0 0.0
        %1288 = vmatprep.subr.mxu0 0.0
        %1289 = vmatpush1.msra.mxu0 0.0
        %1290 = vmatprep.subr.mxu0 0.0
        %1291 = vmatpush1.msra.mxu0 0.0
        %1292 = vmatprep.subr.mxu0 0.0
        %1293 = vmatpush1.msra.mxu0 0.0
        %1294 = vmatprep.subr.mxu0 0.0
        %1295 = vmatpush1.msra.mxu0 0.0
        %1296 = vmatprep.subr.mxu0 0.0
        %1297 = vmatpush1.msra.mxu0 0.0
        %1298 = vmatprep.subr.mxu0 0.0
        %1299 = vmatpush1.msra.mxu0 0.0
        %1300 = vmatprep.subr.mxu0 0.0
        %1301 = vmatpush1.msra.mxu0 0.0
        %1302 = vmatprep.mubr.f32.mxu0 0.0
        %1303 = vmatmul.mubr.f32.gmra.mrb[0].mxu0 %v1236
        %v1304 = vpop.f32.mrb[0].mxu0
        %v1305 = vadd.f32 %v1201, %v1304
        %v1306 = vpop.f32.mrb[0].mxu0
        %1307 = vdwg.mxu0
        %1308 = vxpose.xlu0.b32.start [1/16] %v1198, 128
        %1309 = vxpose.xlu0.b32.cont [2/16] 0.0, 128
        %1310 = vxpose.xlu0.b32.cont [3/16] 0.0, 128
        %1311 = vxpose.xlu0.b32.cont [4/16] 0.0, 128
        %1312 = vxpose.xlu0.b32.cont [5/16] 0.0, 128
        %1313 = vxpose.xlu0.b32.cont [6/16] 0.0, 128
        %1314 = vxpose.xlu0.b32.cont [7/16] 0.0, 128
        %1315 = vxpose.xlu0.b32.cont [8/16] 0.0, 128
        %1316 = vxpose.xlu0.b32.cont [9/16] 0.0, 128
        %1317 = vxpose.xlu0.b32.cont [10/16] 0.0, 128
        %1318 = vxpose.xlu0.b32.cont [11/16] 0.0, 128
        %1319 = vxpose.xlu0.b32.cont [12/16] 0.0, 128
        %1320 = vxpose.xlu0.b32.cont [13/16] 0.0, 128
        %1321 = vxpose.xlu0.b32.cont [14/16] 0.0, 128
        %1322 = vxpose.xlu0.b32.cont [15/16] 0.0, 128
        %1323 = vxpose.xlu0.b32.end [16/16] 0.0, 128
        %v1324 = vpop.trf.xlu0
        %v1325 = vpop.trf.xlu0
        %v1326 = vpop.trf.xlu0
        %v1327 = vpop.trf.xlu0
        %v1328 = vpop.trf.xlu0
        %v1329 = vpop.trf.xlu0
        %v1330 = vpop.trf.xlu0
        %v1331 = vpop.trf.xlu0
        %v1332 = vpop.trf.xlu0
        %v1333 = vpop.trf.xlu0
        %v1334 = vpop.trf.xlu0
        %v1335 = vpop.trf.xlu0
        %v1336 = vpop.trf.xlu0
        %v1337 = vpop.trf.xlu0
        %v1338 = vpop.trf.xlu0
        %v1339 = vpop.trf.xlu0
        %v1341 = vsel %vm1234, %v1324, 0
        %1343 = vmatprep.subr.mxu0 0.0
        %1344 = vmatpush1.msra.mxu0 %v1164
        %1345 = vmatprep.subr.mxu0 0.0
        %1346 = vmatpush1.msra.mxu0 0.0
        %1347 = vmatprep.subr.mxu0 0.0
        %1348 = vmatpush1.msra.mxu0 0.0
        %1349 = vmatprep.subr.mxu0 0.0
        %1350 = vmatpush1.msra.mxu0 0.0
        %1351 = vmatprep.subr.mxu0 0.0
        %1352 = vmatpush1.msra.mxu0 0.0
        %1353 = vmatprep.subr.mxu0 0.0
        %1354 = vmatpush1.msra.mxu0 0.0
        %1355 = vmatprep.subr.mxu0 0.0
        %1356 = vmatpush1.msra.mxu0 0.0
        %1357 = vmatprep.subr.mxu0 0.0
        %1358 = vmatpush1.msra.mxu0 0.0
        %1359 = vmatprep.subr.mxu0 0.0
        %1360 = vmatpush1.msra.mxu0 0.0
        %1361 = vmatprep.subr.mxu0 0.0
        %1362 = vmatpush1.msra.mxu0 0.0
        %1363 = vmatprep.subr.mxu0 0.0
        %1364 = vmatpush1.msra.mxu0 0.0
        %1365 = vmatprep.subr.mxu0 0.0
        %1366 = vmatpush1.msra.mxu0 0.0
        %1367 = vmatprep.subr.mxu0 0.0
        %1368 = vmatpush1.msra.mxu0 0.0
        %1369 = vmatprep.subr.mxu0 0.0
        %1370 = vmatpush1.msra.mxu0 0.0
        %1371 = vmatprep.subr.mxu0 0.0
        %1372 = vmatpush1.msra.mxu0 0.0
        %1373 = vmatprep.subr.mxu0 0.0
        %1374 = vmatpush1.msra.mxu0 0.0
        %1375 = vmatprep.subr.mxu0 0.0
        %1376 = vmatpush1.msra.mxu0 0.0
        %1377 = vmatprep.subr.mxu0 0.0
        %1378 = vmatpush1.msra.mxu0 0.0
        %1379 = vmatprep.subr.mxu0 0.0
        %1380 = vmatpush1.msra.mxu0 0.0
        %1381 = vmatprep.subr.mxu0 0.0
        %1382 = vmatpush1.msra.mxu0 0.0
        %1383 = vmatprep.subr.mxu0 0.0
        %1384 = vmatpush1.msra.mxu0 0.0
        %1385 = vmatprep.subr.mxu0 0.0
        %1386 = vmatpush1.msra.mxu0 0.0
        %1387 = vmatprep.subr.mxu0 0.0
        %1388 = vmatpush1.msra.mxu0 0.0
        %1389 = vmatprep.subr.mxu0 0.0
        %1390 = vmatpush1.msra.mxu0 0.0
        %1391 = vmatprep.subr.mxu0 0.0
        %1392 = vmatpush1.msra.mxu0 0.0
        %1393 = vmatprep.subr.mxu0 0.0
        %1394 = vmatpush1.msra.mxu0 0.0
        %1395 = vmatprep.subr.mxu0 0.0
        %1396 = vmatpush1.msra.mxu0 0.0
        %1397 = vmatprep.subr.mxu0 0.0
        %1398 = vmatpush1.msra.mxu0 0.0
        %1399 = vmatprep.subr.mxu0 0.0
        %1400 = vmatpush1.msra.mxu0 0.0
        %1401 = vmatprep.subr.mxu0 0.0
        %1402 = vmatpush1.msra.mxu0 0.0
        %1403 = vmatprep.subr.mxu0 0.0
        %1404 = vmatpush1.msra.mxu0 0.0
        %1405 = vmatprep.subr.mxu0 0.0
        %1406 = vmatpush1.msra.mxu0 0.0
        %1407 = vmatprep.mubr.f32.mxu0 0.0
        %1408 = vmatmul.mubr.f32.gmra.mrb[0].mxu0 %v1341
        %v1409 = vpop.f32.mrb[0].mxu0
        %v1410 = vadd.f32 %v1201, %v1409
        %v1411 = vpop.f32.mrb[0].mxu0
        %1412 = vdwg.mxu0
        %1413 = vxpose.xlu0.b32.start [1/16] %v1199, 128
        %1414 = vxpose.xlu0.b32.cont [2/16] 0.0, 128
        %1415 = vxpose.xlu0.b32.cont [3/16] 0.0, 128
        %1416 = vxpose.xlu0.b32.cont [4/16] 0.0, 128
        %1417 = vxpose.xlu0.b32.cont [5/16] 0.0, 128
        %1418 = vxpose.xlu0.b32.cont [6/16] 0.0, 128
        %1419 = vxpose.xlu0.b32.cont [7/16] 0.0, 128
        %1420 = vxpose.xlu0.b32.cont [8/16] 0.0, 128
        %1421 = vxpose.xlu0.b32.cont [9/16] 0.0, 128
        %1422 = vxpose.xlu0.b32.cont [10/16] 0.0, 128
        %1423 = vxpose.xlu0.b32.cont [11/16] 0.0, 128
        %1424 = vxpose.xlu0.b32.cont [12/16] 0.0, 128
        %1425 = vxpose.xlu0.b32.cont [13/16] 0.0, 128
        %1426 = vxpose.xlu0.b32.cont [14/16] 0.0, 128
        %1427 = vxpose.xlu0.b32.cont [15/16] 0.0, 128
        %1428 = vxpose.xlu0.b32.end [16/16] 0.0, 128
        %v1429 = vpop.trf.xlu0
        %v1430 = vpop.trf.xlu0
        %v1431 = vpop.trf.xlu0
        %v1432 = vpop.trf.xlu0
        %v1433 = vpop.trf.xlu0
        %v1434 = vpop.trf.xlu0
        %v1435 = vpop.trf.xlu0
        %v1436 = vpop.trf.xlu0
        %v1437 = vpop.trf.xlu0
        %v1438 = vpop.trf.xlu0
        %v1439 = vpop.trf.xlu0
        %v1440 = vpop.trf.xlu0
        %v1441 = vpop.trf.xlu0
        %v1442 = vpop.trf.xlu0
        %v1443 = vpop.trf.xlu0
        %v1444 = vpop.trf.xlu0
        %v1446 = vsel %vm1234, %v1429, 0
        %1448 = vmatprep.subr.mxu0 0.0
        %1449 = vmatpush1.msra.mxu0 %v1169
        %1450 = vmatprep.subr.mxu0 0.0
        %1451 = vmatpush1.msra.mxu0 0.0
        %1452 = vmatprep.subr.mxu0 0.0
        %1453 = vmatpush1.msra.mxu0 0.0
        %1454 = vmatprep.subr.mxu0 0.0
        %1455 = vmatpush1.msra.mxu0 0.0
        %1456 = vmatprep.subr.mxu0 0.0
        %1457 = vmatpush1.msra.mxu0 0.0
        %1458 = vmatprep.subr.mxu0 0.0
        %1459 = vmatpush1.msra.mxu0 0.0
        %1460 = vmatprep.subr.mxu0 0.0
        %1461 = vmatpush1.msra.mxu0 0.0
        %1462 = vmatprep.subr.mxu0 0.0
        %1463 = vmatpush1.msra.mxu0 0.0
        %1464 = vmatprep.subr.mxu0 0.0
        %1465 = vmatpush1.msra.mxu0 0.0
        %1466 = vmatprep.subr.mxu0 0.0
        %1467 = vmatpush1.msra.mxu0 0.0
        %1468 = vmatprep.subr.mxu0 0.0
        %1469 = vmatpush1.msra.mxu0 0.0
        %1470 = vmatprep.subr.mxu0 0.0
        %1471 = vmatpush1.msra.mxu0 0.0
        %1472 = vmatprep.subr.mxu0 0.0
        %1473 = vmatpush1.msra.mxu0 0.0
        %1474 = vmatprep.subr.mxu0 0.0
        %1475 = vmatpush1.msra.mxu0 0.0
        %1476 = vmatprep.subr.mxu0 0.0
        %1477 = vmatpush1.msra.mxu0 0.0
        %1478 = vmatprep.subr.mxu0 0.0
        %1479 = vmatpush1.msra.mxu0 0.0
        %1480 = vmatprep.subr.mxu0 0.0
        %1481 = vmatpush1.msra.mxu0 0.0
        %1482 = vmatprep.subr.mxu0 0.0
        %1483 = vmatpush1.msra.mxu0 0.0
        %1484 = vmatprep.subr.mxu0 0.0
        %1485 = vmatpush1.msra.mxu0 0.0
        %1486 = vmatprep.subr.mxu0 0.0
        %1487 = vmatpush1.msra.mxu0 0.0
        %1488 = vmatprep.subr.mxu0 0.0
        %1489 = vmatpush1.msra.mxu0 0.0
        %1490 = vmatprep.subr.mxu0 0.0
        %1491 = vmatpush1.msra.mxu0 0.0
        %1492 = vmatprep.subr.mxu0 0.0
        %1493 = vmatpush1.msra.mxu0 0.0
        %1494 = vmatprep.subr.mxu0 0.0
        %1495 = vmatpush1.msra.mxu0 0.0
        %1496 = vmatprep.subr.mxu0 0.0
        %1497 = vmatpush1.msra.mxu0 0.0
        %1498 = vmatprep.subr.mxu0 0.0
        %1499 = vmatpush1.msra.mxu0 0.0
        %1500 = vmatprep.subr.mxu0 0.0
        %1501 = vmatpush1.msra.mxu0 0.0
        %1502 = vmatprep.subr.mxu0 0.0
        %1503 = vmatpush1.msra.mxu0 0.0
        %1504 = vmatprep.subr.mxu0 0.0
        %1505 = vmatpush1.msra.mxu0 0.0
        %1506 = vmatprep.subr.mxu0 0.0
        %1507 = vmatpush1.msra.mxu0 0.0
        %1508 = vmatprep.subr.mxu0 0.0
        %1509 = vmatpush1.msra.mxu0 0.0
        %1510 = vmatprep.subr.mxu0 0.0
        %1511 = vmatpush1.msra.mxu0 0.0
        %1512 = vmatprep.mubr.f32.mxu0 0.0
        %1513 = vmatmul.mubr.f32.gmra.mrb[0].mxu0 %v1446
        %v1514 = vpop.f32.mrb[0].mxu0
        %v1515 = vadd.f32 %v1201, %v1514
        %v1516 = vpop.f32.mrb[0].mxu0
        %1517 = vdwg.mxu0
        %1518 = vxpose.xlu0.b32.start [1/16] %v1200, 128
        %1519 = vxpose.xlu0.b32.cont [2/16] 0.0, 128
        %1520 = vxpose.xlu0.b32.cont [3/16] 0.0, 128
        %1521 = vxpose.xlu0.b32.cont [4/16] 0.0, 128
        %1522 = vxpose.xlu0.b32.cont [5/16] 0.0, 128
        %1523 = vxpose.xlu0.b32.cont [6/16] 0.0, 128
        %1524 = vxpose.xlu0.b32.cont [7/16] 0.0, 128
        %1525 = vxpose.xlu0.b32.cont [8/16] 0.0, 128
        %1526 = vxpose.xlu0.b32.cont [9/16] 0.0, 128
        %1527 = vxpose.xlu0.b32.cont [10/16] 0.0, 128
        %1528 = vxpose.xlu0.b32.cont [11/16] 0.0, 128
        %1529 = vxpose.xlu0.b32.cont [12/16] 0.0, 128
        %1530 = vxpose.xlu0.b32.cont [13/16] 0.0, 128
        %1531 = vxpose.xlu0.b32.cont [14/16] 0.0, 128
        %1532 = vxpose.xlu0.b32.cont [15/16] 0.0, 128
        %1533 = vxpose.xlu0.b32.end [16/16] 0.0, 128
        %v1534 = vpop.trf.xlu0
        %v1535 = vpop.trf.xlu0
        %v1536 = vpop.trf.xlu0
        %v1537 = vpop.trf.xlu0
        %v1538 = vpop.trf.xlu0
        %v1539 = vpop.trf.xlu0
        %v1540 = vpop.trf.xlu0
        %v1541 = vpop.trf.xlu0
        %v1542 = vpop.trf.xlu0
        %v1543 = vpop.trf.xlu0
        %v1544 = vpop.trf.xlu0
        %v1545 = vpop.trf.xlu0
        %v1546 = vpop.trf.xlu0
        %v1547 = vpop.trf.xlu0
        %v1548 = vpop.trf.xlu0
        %v1549 = vpop.trf.xlu0
        %v1551 = vsel %vm1234, %v1534, 0
        %1553 = vmatprep.subr.mxu0 0.0
        %1554 = vmatpush1.msra.mxu0 %v1174
        %1555 = vmatprep.subr.mxu0 0.0
        %1556 = vmatpush1.msra.mxu0 0.0
        %1557 = vmatprep.subr.mxu0 0.0
        %1558 = vmatpush1.msra.mxu0 0.0
        %1559 = vmatprep.subr.mxu0 0.0
        %1560 = vmatpush1.msra.mxu0 0.0
        %1561 = vmatprep.subr.mxu0 0.0
        %1562 = vmatpush1.msra.mxu0 0.0
        %1563 = vmatprep.subr.mxu0 0.0
        %1564 = vmatpush1.msra.mxu0 0.0
        %1565 = vmatprep.subr.mxu0 0.0
        %1566 = vmatpush1.msra.mxu0 0.0
        %1567 = vmatprep.subr.mxu0 0.0
        %1568 = vmatpush1.msra.mxu0 0.0
        %1569 = vmatprep.subr.mxu0 0.0
        %1570 = vmatpush1.msra.mxu0 0.0
        %1571 = vmatprep.subr.mxu0 0.0
        %1572 = vmatpush1.msra.mxu0 0.0
        %1573 = vmatprep.subr.mxu0 0.0
        %1574 = vmatpush1.msra.mxu0 0.0
        %1575 = vmatprep.subr.mxu0 0.0
        %1576 = vmatpush1.msra.mxu0 0.0
        %1577 = vmatprep.subr.mxu0 0.0
        %1578 = vmatpush1.msra.mxu0 0.0
        %1579 = vmatprep.subr.mxu0 0.0
        %1580 = vmatpush1.msra.mxu0 0.0
        %1581 = vmatprep.subr.mxu0 0.0
        %1582 = vmatpush1.msra.mxu0 0.0
        %1583 = vmatprep.subr.mxu0 0.0
        %1584 = vmatpush1.msra.mxu0 0.0
        %1585 = vmatprep.subr.mxu0 0.0
        %1586 = vmatpush1.msra.mxu0 0.0
        %1587 = vmatprep.subr.mxu0 0.0
        %1588 = vmatpush1.msra.mxu0 0.0
        %1589 = vmatprep.subr.mxu0 0.0
        %1590 = vmatpush1.msra.mxu0 0.0
        %1591 = vmatprep.subr.mxu0 0.0
        %1592 = vmatpush1.msra.mxu0 0.0
        %1593 = vmatprep.subr.mxu0 0.0
        %1594 = vmatpush1.msra.mxu0 0.0
        %1595 = vmatprep.subr.mxu0 0.0
        %1596 = vmatpush1.msra.mxu0 0.0
        %1597 = vmatprep.subr.mxu0 0.0
        %1598 = vmatpush1.msra.mxu0 0.0
        %1599 = vmatprep.subr.mxu0 0.0
        %1600 = vmatpush1.msra.mxu0 0.0
        %1601 = vmatprep.subr.mxu0 0.0
        %1602 = vmatpush1.msra.mxu0 0.0
        %1603 = vmatprep.subr.mxu0 0.0
        %1604 = vmatpush1.msra.mxu0 0.0
        %1605 = vmatprep.subr.mxu0 0.0
        %1606 = vmatpush1.msra.mxu0 0.0
        %1607 = vmatprep.subr.mxu0 0.0
        %1608 = vmatpush1.msra.mxu0 0.0
        %1609 = vmatprep.subr.mxu0 0.0
        %1610 = vmatpush1.msra.mxu0 0.0
        %1611 = vmatprep.subr.mxu0 0.0
        %1612 = vmatpush1.msra.mxu0 0.0
        %1613 = vmatprep.subr.mxu0 0.0
        %1614 = vmatpush1.msra.mxu0 0.0
        %1615 = vmatprep.subr.mxu0 0.0
        %1616 = vmatpush1.msra.mxu0 0.0
        %1617 = vmatprep.mubr.f32.mxu0 0.0
        %1618 = vmatmul.mubr.f32.gmra.mrb[0].mxu0 %v1551
        %v1619 = vpop.f32.mrb[0].mxu0
        %v1620 = vadd.f32 %v1201, %v1619
        %v1621 = vpop.f32.mrb[0].mxu0
        %1622 = vdwg.mxu0
        %v1623 = vsel %vm1234, %v1305, -inf
        %1624 = vmax.xlane.f32.xlu0 %v1623
        %v1625 = vpop.xlane.xlu0 %1624
        %v1626 = vsel %vm1234, %v1410, -inf
        %1627 = vmax.xlane.f32.xlu0 %v1626
        %v1628 = vpop.xlane.xlu0 %1627
        %v1629 = vsel %vm1234, %v1515, -inf
        %1630 = vmax.xlane.f32.xlu0 %v1629
        %v1631 = vpop.xlane.xlu0 %1630
        %v1632 = vsel %vm1234, %v1620, -inf
        %1633 = vmax.xlane.f32.xlu0 %v1632
        %v1634 = vpop.xlane.xlu0 %1633
        %v1635 = vsub.f32 %v1305, %v1625
        %v1636 = vsub.f32 %v1410, %v1628
        %v1637 = vsub.f32 %v1515, %v1631
        %v1638 = vsub.f32 %v1620, %v1634
        %v1639 = vmul.f32 %v1635, 1.442695
        %v1640 = vpow.pop %v1639
        %v1641 = vmul.f32 %v1636, 1.442695
        %v1642 = vpow.pop %v1641
        %v1643 = vmul.f32 %v1637, 1.442695
        %v1644 = vpow.pop %v1643
        %v1645 = vmul.f32 %v1638, 1.442695
        %v1646 = vpow.pop %v1645
        %v1647 = vsel %vm1234, %v1640, 0.0
        %1648 = vadd.xlane.f32.xlu0 %v1647
        %v1649 = vpop.xlane.xlu0 %1648
        %v1650 = vsel %vm1234, %v1642, 0.0
        %1651 = vadd.xlane.f32.xlu0 %v1650
        %v1652 = vpop.xlane.xlu0 %1651
        %v1653 = vsel %vm1234, %v1644, 0.0
        %1654 = vadd.xlane.f32.xlu0 %v1653
        %v1655 = vpop.xlane.xlu0 %1654
        %v1656 = vsel %vm1234, %v1646, 0.0
        %1657 = vadd.xlane.f32.xlu0 %v1656
        %v1658 = vpop.xlane.xlu0 %1657
        %v1659 = vrcp.pop %v1649
        %v1660 = vrcp.pop %v1652
        %v1661 = vrcp.pop %v1655
        %v1662 = vrcp.pop %v1658
        %v1663 = vmul.f32 %v1640, %v1659
        %v1664 = vmul.f32 %v1642, %v1660
        %v1665 = vmul.f32 %v1644, %v1661
        %v1666 = vmul.f32 %v1646, %v1662
        %v1668 = vsel %vm1234, %v1663, 0
        %v1671 = vsel %vm1234, %v1179, 0
        %1673 = vmatprep.subr.mxu0 0.0
        %1674 = vmatpush1.xpose.msra.mxu0 %v1671
        %1675 = vmatprep.subr.mxu0 0.0
        %1676 = vmatpush1.xpose.msra.mxu0 0.0
        %1677 = vmatprep.subr.mxu0 0.0
        %1678 = vmatpush1.xpose.msra.mxu0 0.0
        %1679 = vmatprep.subr.mxu0 0.0
        %1680 = vmatpush1.xpose.msra.mxu0 0.0
        %1681 = vmatprep.subr.mxu0 0.0
        %1682 = vmatpush1.xpose.msra.mxu0 0.0
        %1683 = vmatprep.subr.mxu0 0.0
        %1684 = vmatpush1.xpose.msra.mxu0 0.0
        %1685 = vmatprep.subr.mxu0 0.0
        %1686 = vmatpush1.xpose.msra.mxu0 0.0
        %1687 = vmatprep.subr.mxu0 0.0
        %1688 = vmatpush1.xpose.msra.mxu0 0.0
        %1689 = vmatprep.subr.mxu0 0.0
        %1690 = vmatpush1.xpose.msra.mxu0 0.0
        %1691 = vmatprep.subr.mxu0 0.0
        %1692 = vmatpush1.xpose.msra.mxu0 0.0
        %1693 = vmatprep.subr.mxu0 0.0
        %1694 = vmatpush1.xpose.msra.mxu0 0.0
        %1695 = vmatprep.subr.mxu0 0.0
        %1696 = vmatpush1.xpose.msra.mxu0 0.0
        %1697 = vmatprep.subr.mxu0 0.0
        %1698 = vmatpush1.xpose.msra.mxu0 0.0
        %1699 = vmatprep.subr.mxu0 0.0
        %1700 = vmatpush1.xpose.msra.mxu0 0.0
        %1701 = vmatprep.subr.mxu0 0.0
        %1702 = vmatpush1.xpose.msra.mxu0 0.0
        %1703 = vmatprep.subr.mxu0 0.0
        %1704 = vmatpush1.xpose.msra.mxu0 0.0
        %1705 = vmatprep.subr.mxu0 0.0
        %1706 = vmatpush1.xpose.msra.mxu0 0.0
        %1707 = vmatprep.subr.mxu0 0.0
        %1708 = vmatpush1.xpose.msra.mxu0 0.0
        %1709 = vmatprep.subr.mxu0 0.0
        %1710 = vmatpush1.xpose.msra.mxu0 0.0
        %1711 = vmatprep.subr.mxu0 0.0
        %1712 = vmatpush1.xpose.msra.mxu0 0.0
        %1713 = vmatprep.subr.mxu0 0.0
        %1714 = vmatpush1.xpose.msra.mxu0 0.0
        %1715 = vmatprep.subr.mxu0 0.0
        %1716 = vmatpush1.xpose.msra.mxu0 0.0
        %1717 = vmatprep.subr.mxu0 0.0
        %1718 = vmatpush1.xpose.msra.mxu0 0.0
        %1719 = vmatprep.subr.mxu0 0.0
        %1720 = vmatpush1.xpose.msra.mxu0 0.0
        %1721 = vmatprep.subr.mxu0 0.0
        %1722 = vmatpush1.xpose.msra.mxu0 0.0
        %1723 = vmatprep.subr.mxu0 0.0
        %1724 = vmatpush1.xpose.msra.mxu0 0.0
        %1725 = vmatprep.subr.mxu0 0.0
        %1726 = vmatpush1.xpose.msra.mxu0 0.0
        %1727 = vmatprep.subr.mxu0 0.0
        %1728 = vmatpush1.xpose.msra.mxu0 0.0
        %1729 = vmatprep.subr.mxu0 0.0
        %1730 = vmatpush1.xpose.msra.mxu0 0.0
        %1731 = vmatprep.subr.mxu0 0.0
        %1732 = vmatpush1.xpose.msra.mxu0 0.0
        %1733 = vmatprep.subr.mxu0 0.0
        %1734 = vmatpush1.xpose.msra.mxu0 0.0
        %1735 = vmatprep.subr.mxu0 0.0
        %1736 = vmatpush1.xpose.msra.mxu0 0.0
        %1737 = vmatprep.mubr.f32.mxu0 0.0
        %1738 = vmatmul.mubr.f32.gmra.mrb[0].mxu0 %v1668
        %v1739 = vpop.f32.mrb[0].mxu0
        %v1740 = vadd.f32 0.0, %v1739
        %v1741 = vpop.f32.mrb[0].mxu0
        %1742 = vdwg.mxu0
        %v1744 = vsel %vm1234, %v1664, 0
        %v1747 = vsel %vm1234, %v1184, 0
        %1749 = vmatprep.subr.mxu0 0.0
        %1750 = vmatpush1.xpose.msra.mxu0 %v1747
        %1751 = vmatprep.subr.mxu0 0.0
        %1752 = vmatpush1.xpose.msra.mxu0 0.0
        %1753 = vmatprep.subr.mxu0 0.0
        %1754 = vmatpush1.xpose.msra.mxu0 0.0
        %1755 = vmatprep.subr.mxu0 0.0
        %1756 = vmatpush1.xpose.msra.mxu0 0.0
        %1757 = vmatprep.subr.mxu0 0.0
        %1758 = vmatpush1.xpose.msra.mxu0 0.0
        %1759 = vmatprep.subr.mxu0 0.0
        %1760 = vmatpush1.xpose.msra.mxu0 0.0
        %1761 = vmatprep.subr.mxu0 0.0
        %1762 = vmatpush1.xpose.msra.mxu0 0.0
        %1763 = vmatprep.subr.mxu0 0.0
        %1764 = vmatpush1.xpose.msra.mxu0 0.0
        %1765 = vmatprep.subr.mxu0 0.0
        %1766 = vmatpush1.xpose.msra.mxu0 0.0
        %1767 = vmatprep.subr.mxu0 0.0
        %1768 = vmatpush1.xpose.msra.mxu0 0.0
        %1769 = vmatprep.subr.mxu0 0.0
        %1770 = vmatpush1.xpose.msra.mxu0 0.0
        %1771 = vmatprep.subr.mxu0 0.0
        %1772 = vmatpush1.xpose.msra.mxu0 0.0
        %1773 = vmatprep.subr.mxu0 0.0
        %1774 = vmatpush1.xpose.msra.mxu0 0.0
        %1775 = vmatprep.subr.mxu0 0.0
        %1776 = vmatpush1.xpose.msra.mxu0 0.0
        %1777 = vmatprep.subr.mxu0 0.0
        %1778 = vmatpush1.xpose.msra.mxu0 0.0
        %1779 = vmatprep.subr.mxu0 0.0
        %1780 = vmatpush1.xpose.msra.mxu0 0.0
        %1781 = vmatprep.subr.mxu0 0.0
        %1782 = vmatpush1.xpose.msra.mxu0 0.0
        %1783 = vmatprep.subr.mxu0 0.0
        %1784 = vmatpush1.xpose.msra.mxu0 0.0
        %1785 = vmatprep.subr.mxu0 0.0
        %1786 = vmatpush1.xpose.msra.mxu0 0.0
        %1787 = vmatprep.subr.mxu0 0.0
        %1788 = vmatpush1.xpose.msra.mxu0 0.0
        %1789 = vmatprep.subr.mxu0 0.0
        %1790 = vmatpush1.xpose.msra.mxu0 0.0
        %1791 = vmatprep.subr.mxu0 0.0
        %1792 = vmatpush1.xpose.msra.mxu0 0.0
        %1793 = vmatprep.subr.mxu0 0.0
        %1794 = vmatpush1.xpose.msra.mxu0 0.0
        %1795 = vmatprep.subr.mxu0 0.0
        %1796 = vmatpush1.xpose.msra.mxu0 0.0
        %1797 = vmatprep.subr.mxu0 0.0
        %1798 = vmatpush1.xpose.msra.mxu0 0.0
        %1799 = vmatprep.subr.mxu0 0.0
        %1800 = vmatpush1.xpose.msra.mxu0 0.0
        %1801 = vmatprep.subr.mxu0 0.0
        %1802 = vmatpush1.xpose.msra.mxu0 0.0
        %1803 = vmatprep.subr.mxu0 0.0
        %1804 = vmatpush1.xpose.msra.mxu0 0.0
        %1805 = vmatprep.subr.mxu0 0.0
        %1806 = vmatpush1.xpose.msra.mxu0 0.0
        %1807 = vmatprep.subr.mxu0 0.0
        %1808 = vmatpush1.xpose.msra.mxu0 0.0
        %1809 = vmatprep.subr.mxu0 0.0
        %1810 = vmatpush1.xpose.msra.mxu0 0.0
        %1811 = vmatprep.subr.mxu0 0.0
        %1812 = vmatpush1.xpose.msra.mxu0 0.0
        %1813 = vmatprep.mubr.f32.mxu0 0.0
        %1814 = vmatmul.mubr.f32.gmra.mrb[0].mxu0 %v1744
        %v1815 = vpop.f32.mrb[0].mxu0
        %v1816 = vadd.f32 0.0, %v1815
        %v1817 = vpop.f32.mrb[0].mxu0
        %1818 = vdwg.mxu0
        %v1820 = vsel %vm1234, %v1665, 0
        %v1823 = vsel %vm1234, %v1189, 0
        %1825 = vmatprep.subr.mxu0 0.0
        %1826 = vmatpush1.xpose.msra.mxu0 %v1823
        %1827 = vmatprep.subr.mxu0 0.0
        %1828 = vmatpush1.xpose.msra.mxu0 0.0
        %1829 = vmatprep.subr.mxu0 0.0
        %1830 = vmatpush1.xpose.msra.mxu0 0.0
        %1831 = vmatprep.subr.mxu0 0.0
        %1832 = vmatpush1.xpose.msra.mxu0 0.0
        %1833 = vmatprep.subr.mxu0 0.0
        %1834 = vmatpush1.xpose.msra.mxu0 0.0
        %1835 = vmatprep.subr.mxu0 0.0
        %1836 = vmatpush1.xpose.msra.mxu0 0.0
        %1837 = vmatprep.subr.mxu0 0.0
        %1838 = vmatpush1.xpose.msra.mxu0 0.0
        %1839 = vmatprep.subr.mxu0 0.0
        %1840 = vmatpush1.xpose.msra.mxu0 0.0
        %1841 = vmatprep.subr.mxu0 0.0
        %1842 = vmatpush1.xpose.msra.mxu0 0.0
        %1843 = vmatprep.subr.mxu0 0.0
        %1844 = vmatpush1.xpose.msra.mxu0 0.0
        %1845 = vmatprep.subr.mxu0 0.0
        %1846 = vmatpush1.xpose.msra.mxu0 0.0
        %1847 = vmatprep.subr.mxu0 0.0
        %1848 = vmatpush1.xpose.msra.mxu0 0.0
        %1849 = vmatprep.subr.mxu0 0.0
        %1850 = vmatpush1.xpose.msra.mxu0 0.0
        %1851 = vmatprep.subr.mxu0 0.0
        %1852 = vmatpush1.xpose.msra.mxu0 0.0
        %1853 = vmatprep.subr.mxu0 0.0
        %1854 = vmatpush1.xpose.msra.mxu0 0.0
        %1855 = vmatprep.subr.mxu0 0.0
        %1856 = vmatpush1.xpose.msra.mxu0 0.0
        %1857 = vmatprep.subr.mxu0 0.0
        %1858 = vmatpush1.xpose.msra.mxu0 0.0
        %1859 = vmatprep.subr.mxu0 0.0
        %1860 = vmatpush1.xpose.msra.mxu0 0.0
        %1861 = vmatprep.subr.mxu0 0.0
        %1862 = vmatpush1.xpose.msra.mxu0 0.0
        %1863 = vmatprep.subr.mxu0 0.0
        %1864 = vmatpush1.xpose.msra.mxu0 0.0
        %1865 = vmatprep.subr.mxu0 0.0
        %1866 = vmatpush1.xpose.msra.mxu0 0.0
        %1867 = vmatprep.subr.mxu0 0.0
        %1868 = vmatpush1.xpose.msra.mxu0 0.0
        %1869 = vmatprep.subr.mxu0 0.0
        %1870 = vmatpush1.xpose.msra.mxu0 0.0
        %1871 = vmatprep.subr.mxu0 0.0
        %1872 = vmatpush1.xpose.msra.mxu0 0.0
        %1873 = vmatprep.subr.mxu0 0.0
        %1874 = vmatpush1.xpose.msra.mxu0 0.0
        %1875 = vmatprep.subr.mxu0 0.0
        %1876 = vmatpush1.xpose.msra.mxu0 0.0
        %1877 = vmatprep.subr.mxu0 0.0
        %1878 = vmatpush1.xpose.msra.mxu0 0.0
        %1879 = vmatprep.subr.mxu0 0.0
        %1880 = vmatpush1.xpose.msra.mxu0 0.0
        %1881 = vmatprep.subr.mxu0 0.0
        %1882 = vmatpush1.xpose.msra.mxu0 0.0
        %1883 = vmatprep.subr.mxu0 0.0
        %1884 = vmatpush1.xpose.msra.mxu0 0.0
        %1885 = vmatprep.subr.mxu0 0.0
        %1886 = vmatpush1.xpose.msra.mxu0 0.0
        %1887 = vmatprep.subr.mxu0 0.0
        %1888 = vmatpush1.xpose.msra.mxu0 0.0
        %1889 = vmatprep.mubr.f32.mxu0 0.0
        %1890 = vmatmul.mubr.f32.gmra.mrb[0].mxu0 %v1820
        %v1891 = vpop.f32.mrb[0].mxu0
        %v1892 = vadd.f32 0.0, %v1891
        %v1893 = vpop.f32.mrb[0].mxu0
        %1894 = vdwg.mxu0
        %v1896 = vsel %vm1234, %v1666, 0
        %v1899 = vsel %vm1234, %v1194, 0
        %1901 = vmatprep.subr.mxu0 0.0
        %1902 = vmatpush1.xpose.msra.mxu0 %v1899
        %1903 = vmatprep.subr.mxu0 0.0
        %1904 = vmatpush1.xpose.msra.mxu0 0.0
        %1905 = vmatprep.subr.mxu0 0.0
        %1906 = vmatpush1.xpose.msra.mxu0 0.0
        %1907 = vmatprep.subr.mxu0 0.0
        %1908 = vmatpush1.xpose.msra.mxu0 0.0
        %1909 = vmatprep.subr.mxu0 0.0
        %1910 = vmatpush1.xpose.msra.mxu0 0.0
        %1911 = vmatprep.subr.mxu0 0.0
        %1912 = vmatpush1.xpose.msra.mxu0 0.0
        %1913 = vmatprep.subr.mxu0 0.0
        %1914 = vmatpush1.xpose.msra.mxu0 0.0
        %1915 = vmatprep.subr.mxu0 0.0
        %1916 = vmatpush1.xpose.msra.mxu0 0.0
        %1917 = vmatprep.subr.mxu0 0.0
        %1918 = vmatpush1.xpose.msra.mxu0 0.0
        %1919 = vmatprep.subr.mxu0 0.0
        %1920 = vmatpush1.xpose.msra.mxu0 0.0
        %1921 = vmatprep.subr.mxu0 0.0
        %1922 = vmatpush1.xpose.msra.mxu0 0.0
        %1923 = vmatprep.subr.mxu0 0.0
        %1924 = vmatpush1.xpose.msra.mxu0 0.0
        %1925 = vmatprep.subr.mxu0 0.0
        %1926 = vmatpush1.xpose.msra.mxu0 0.0
        %1927 = vmatprep.subr.mxu0 0.0
        %1928 = vmatpush1.xpose.msra.mxu0 0.0
        %1929 = vmatprep.subr.mxu0 0.0
        %1930 = vmatpush1.xpose.msra.mxu0 0.0
        %1931 = vmatprep.subr.mxu0 0.0
        %1932 = vmatpush1.xpose.msra.mxu0 0.0
        %1933 = vmatprep.subr.mxu0 0.0
        %1934 = vmatpush1.xpose.msra.mxu0 0.0
        %1935 = vmatprep.subr.mxu0 0.0
        %1936 = vmatpush1.xpose.msra.mxu0 0.0
        %1937 = vmatprep.subr.mxu0 0.0
        %1938 = vmatpush1.xpose.msra.mxu0 0.0
        %1939 = vmatprep.subr.mxu0 0.0
        %1940 = vmatpush1.xpose.msra.mxu0 0.0
        %1941 = vmatprep.subr.mxu0 0.0
        %1942 = vmatpush1.xpose.msra.mxu0 0.0
        %1943 = vmatprep.subr.mxu0 0.0
        %1944 = vmatpush1.xpose.msra.mxu0 0.0
        %1945 = vmatprep.subr.mxu0 0.0
        %1946 = vmatpush1.xpose.msra.mxu0 0.0
        %1947 = vmatprep.subr.mxu0 0.0
        %1948 = vmatpush1.xpose.msra.mxu0 0.0
        %1949 = vmatprep.subr.mxu0 0.0
        %1950 = vmatpush1.xpose.msra.mxu0 0.0
        %1951 = vmatprep.subr.mxu0 0.0
        %1952 = vmatpush1.xpose.msra.mxu0 0.0
        %1953 = vmatprep.subr.mxu0 0.0
        %1954 = vmatpush1.xpose.msra.mxu0 0.0
        %1955 = vmatprep.subr.mxu0 0.0
        %1956 = vmatpush1.xpose.msra.mxu0 0.0
        %1957 = vmatprep.subr.mxu0 0.0
        %1958 = vmatpush1.xpose.msra.mxu0 0.0
        %1959 = vmatprep.subr.mxu0 0.0
        %1960 = vmatpush1.xpose.msra.mxu0 0.0
        %1961 = vmatprep.subr.mxu0 0.0
        %1962 = vmatpush1.xpose.msra.mxu0 0.0
        %1963 = vmatprep.subr.mxu0 0.0
        %1964 = vmatpush1.xpose.msra.mxu0 0.0
        %1965 = vmatprep.mubr.f32.mxu0 0.0
        %1966 = vmatmul.mubr.f32.gmra.mrb[0].mxu0 %v1896
        %v1967 = vpop.f32.mrb[0].mxu0
        %v1968 = vadd.f32 0.0, %v1967
        %v1969 = vpop.f32.mrb[0].mxu0
        %1970 = vdwg.mxu0
        %v1971 = vld [vmem:[%s754] sm:$0xff]
        %v1972 = vld [vmem:[%s754 + $0x8] sm:$0xff]
        %v1973 = vld [vmem:[%s754 + $0x10] sm:$0xff]
        %v1974 = vld [vmem:[%s754 + $0x18] sm:$0xff]
        %v1976 = vsel %vm1234, %v1740, 0
        %1978 = vmatprep.subr.mxu0 0.0
        %1979 = vmatpush1.msra.mxu0 %v1971
        %1980 = vmatprep.subr.mxu0 0.0
        %1981 = vmatpush1.msra.mxu0 0.0
        %1982 = vmatprep.subr.mxu0 0.0
        %1983 = vmatpush1.msra.mxu0 0.0
        %1984 = vmatprep.subr.mxu0 0.0
        %1985 = vmatpush1.msra.mxu0 0.0
        %1986 = vmatprep.subr.mxu0 0.0
        %1987 = vmatpush1.msra.mxu0 0.0
        %1988 = vmatprep.subr.mxu0 0.0
        %1989 = vmatpush1.msra.mxu0 0.0
        %1990 = vmatprep.subr.mxu0 0.0
        %1991 = vmatpush1.msra.mxu0 0.0
        %1992 = vmatprep.subr.mxu0 0.0
        %1993 = vmatpush1.msra.mxu0 0.0
        %1994 = vmatprep.subr.mxu0 0.0
        %1995 = vmatpush1.msra.mxu0 0.0
        %1996 = vmatprep.subr.mxu0 0.0
        %1997 = vmatpush1.msra.mxu0 0.0
        %1998 = vmatprep.subr.mxu0 0.0
        %1999 = vmatpush1.msra.mxu0 0.0
        %2000 = vmatprep.subr.mxu0 0.0
        %2001 = vmatpush1.msra.mxu0 0.0
        %2002 = vmatprep.subr.mxu0 0.0
        %2003 = vmatpush1.msra.mxu0 0.0
        %2004 = vmatprep.subr.mxu0 0.0
        %2005 = vmatpush1.msra.mxu0 0.0
        %2006 = vmatprep.subr.mxu0 0.0
        %2007 = vmatpush1.msra.mxu0 0.0
        %2008 = vmatprep.subr.mxu0 0.0
        %2009 = vmatpush1.msra.mxu0 0.0
        %2010 = vmatprep.subr.mxu0 0.0
        %2011 = vmatpush1.msra.mxu0 0.0
        %2012 = vmatprep.subr.mxu0 0.0
        %2013 = vmatpush1.msra.mxu0 0.0
        %2014 = vmatprep.subr.mxu0 0.0
        %2015 = vmatpush1.msra.mxu0 0.0
        %2016 = vmatprep.subr.mxu0 0.0
        %2017 = vmatpush1.msra.mxu0 0.0
        %2018 = vmatprep.subr.mxu0 0.0
        %2019 = vmatpush1.msra.mxu0 0.0
        %2020 = vmatprep.subr.mxu0 0.0
        %2021 = vmatpush1.msra.mxu0 0.0
        %2022 = vmatprep.subr.mxu0 0.0
        %2023 = vmatpush1.msra.mxu0 0.0
        %2024 = vmatprep.subr.mxu0 0.0
        %2025 = vmatpush1.msra.mxu0 0.0
        %2026 = vmatprep.subr.mxu0 0.0
        %2027 = vmatpush1.msra.mxu0 0.0
        %2028 = vmatprep.subr.mxu0 0.0
        %2029 = vmatpush1.msra.mxu0 0.0
        %2030 = vmatprep.subr.mxu0 0.0
        %2031 = vmatpush1.msra.mxu0 0.0
        %2032 = vmatprep.subr.mxu0 0.0
        %2033 = vmatpush1.msra.mxu0 0.0
        %2034 = vmatprep.subr.mxu0 0.0
        %2035 = vmatpush1.msra.mxu0 0.0
        %2036 = vmatprep.subr.mxu0 0.0
        %2037 = vmatpush1.msra.mxu0 0.0
        %2038 = vmatprep.subr.mxu0 0.0
        %2039 = vmatpush1.msra.mxu0 0.0
        %2040 = vmatprep.subr.mxu0 0.0
        %2041 = vmatpush1.msra.mxu0 0.0
        %2042 = vmatprep.mubr.f32.mxu0 0.0
        %2043 = vmatmul.mubr.f32.gmra.mrb[0].mxu0 %v1976
        %v2044 = vpop.f32.mrb[0].mxu0
        %v2045 = vadd.f32 0.0, %v2044
        %v2046 = vpop.f32.mrb[0].mxu0
        %2047 = vdwg.mxu0
        %v2049 = vsel %vm1234, %v1816, 0
        %2051 = vmatprep.subr.mxu0 0.0
        %2052 = vmatpush1.msra.mxu0 %v1972
        %2053 = vmatprep.subr.mxu0 0.0
        %2054 = vmatpush1.msra.mxu0 0.0
        %2055 = vmatprep.subr.mxu0 0.0
        %2056 = vmatpush1.msra.mxu0 0.0
        %2057 = vmatprep.subr.mxu0 0.0
        %2058 = vmatpush1.msra.mxu0 0.0
        %2059 = vmatprep.subr.mxu0 0.0
        %2060 = vmatpush1.msra.mxu0 0.0
        %2061 = vmatprep.subr.mxu0 0.0
        %2062 = vmatpush1.msra.mxu0 0.0
        %2063 = vmatprep.subr.mxu0 0.0
        %2064 = vmatpush1.msra.mxu0 0.0
        %2065 = vmatprep.subr.mxu0 0.0
        %2066 = vmatpush1.msra.mxu0 0.0
        %2067 = vmatprep.subr.mxu0 0.0
        %2068 = vmatpush1.msra.mxu0 0.0
        %2069 = vmatprep.subr.mxu0 0.0
        %2070 = vmatpush1.msra.mxu0 0.0
        %2071 = vmatprep.subr.mxu0 0.0
        %2072 = vmatpush1.msra.mxu0 0.0
        %2073 = vmatprep.subr.mxu0 0.0
        %2074 = vmatpush1.msra.mxu0 0.0
        %2075 = vmatprep.subr.mxu0 0.0
        %2076 = vmatpush1.msra.mxu0 0.0
        %2077 = vmatprep.subr.mxu0 0.0
        %2078 = vmatpush1.msra.mxu0 0.0
        %2079 = vmatprep.subr.mxu0 0.0
        %2080 = vmatpush1.msra.mxu0 0.0
        %2081 = vmatprep.subr.mxu0 0.0
        %2082 = vmatpush1.msra.mxu0 0.0
        %2083 = vmatprep.subr.mxu0 0.0
        %2084 = vmatpush1.msra.mxu0 0.0
        %2085 = vmatprep.subr.mxu0 0.0
        %2086 = vmatpush1.msra.mxu0 0.0
        %2087 = vmatprep.subr.mxu0 0.0
        %2088 = vmatpush1.msra.mxu0 0.0
        %2089 = vmatprep.subr.mxu0 0.0
        %2090 = vmatpush1.msra.mxu0 0.0
        %2091 = vmatprep.subr.mxu0 0.0
        %2092 = vmatpush1.msra.mxu0 0.0
        %2093 = vmatprep.subr.mxu0 0.0
        %2094 = vmatpush1.msra.mxu0 0.0
        %2095 = vmatprep.subr.mxu0 0.0
        %2096 = vmatpush1.msra.mxu0 0.0
        %2097 = vmatprep.subr.mxu0 0.0
        %2098 = vmatpush1.msra.mxu0 0.0
        %2099 = vmatprep.subr.mxu0 0.0
        %2100 = vmatpush1.msra.mxu0 0.0
        %2101 = vmatprep.subr.mxu0 0.0
        %2102 = vmatpush1.msra.mxu0 0.0
        %2103 = vmatprep.subr.mxu0 0.0
        %2104 = vmatpush1.msra.mxu0 0.0
        %2105 = vmatprep.subr.mxu0 0.0
        %2106 = vmatpush1.msra.mxu0 0.0
        %2107 = vmatprep.subr.mxu0 0.0
        %2108 = vmatpush1.msra.mxu0 0.0
        %2109 = vmatprep.subr.mxu0 0.0
        %2110 = vmatpush1.msra.mxu0 0.0
        %2111 = vmatprep.subr.mxu0 0.0
        %2112 = vmatpush1.msra.mxu0 0.0
        %2113 = vmatprep.subr.mxu0 0.0
        %2114 = vmatpush1.msra.mxu0 0.0
        %2115 = vmatprep.mubr.f32.mxu0 0.0
        %2116 = vmatmul.mubr.f32.gmra.mrb[0].mxu0 %v2049
        %v2117 = vpop.f32.mrb[0].mxu0
        %v2118 = vadd.f32 0.0, %v2117
        %v2119 = vpop.f32.mrb[0].mxu0
        %2120 = vdwg.mxu0
        %v2122 = vsel %vm1234, %v1892, 0
        %2124 = vmatprep.subr.mxu0 0.0
        %2125 = vmatpush1.msra.mxu0 %v1973
        %2126 = vmatprep.subr.mxu0 0.0
        %2127 = vmatpush1.msra.mxu0 0.0
        %2128 = vmatprep.subr.mxu0 0.0
        %2129 = vmatpush1.msra.mxu0 0.0
        %2130 = vmatprep.subr.mxu0 0.0
        %2131 = vmatpush1.msra.mxu0 0.0
        %2132 = vmatprep.subr.mxu0 0.0
        %2133 = vmatpush1.msra.mxu0 0.0
        %2134 = vmatprep.subr.mxu0 0.0
        %2135 = vmatpush1.msra.mxu0 0.0
        %2136 = vmatprep.subr.mxu0 0.0
        %2137 = vmatpush1.msra.mxu0 0.0
        %2138 = vmatprep.subr.mxu0 0.0
        %2139 = vmatpush1.msra.mxu0 0.0
        %2140 = vmatprep.subr.mxu0 0.0
        %2141 = vmatpush1.msra.mxu0 0.0
        %2142 = vmatprep.subr.mxu0 0.0
        %2143 = vmatpush1.msra.mxu0 0.0
        %2144 = vmatprep.subr.mxu0 0.0
        %2145 = vmatpush1.msra.mxu0 0.0
        %2146 = vmatprep.subr.mxu0 0.0
        %2147 = vmatpush1.msra.mxu0 0.0
        %2148 = vmatprep.subr.mxu0 0.0
        %2149 = vmatpush1.msra.mxu0 0.0
        %2150 = vmatprep.subr.mxu0 0.0
        %2151 = vmatpush1.msra.mxu0 0.0
        %2152 = vmatprep.subr.mxu0 0.0
        %2153 = vmatpush1.msra.mxu0 0.0
        %2154 = vmatprep.subr.mxu0 0.0
        %2155 = vmatpush1.msra.mxu0 0.0
        %2156 = vmatprep.subr.mxu0 0.0
        %2157 = vmatpush1.msra.mxu0 0.0
        %2158 = vmatprep.subr.mxu0 0.0
        %2159 = vmatpush1.msra.mxu0 0.0
        %2160 = vmatprep.subr.mxu0 0.0
        %2161 = vmatpush1.msra.mxu0 0.0
        %2162 = vmatprep.subr.mxu0 0.0
        %2163 = vmatpush1.msra.mxu0 0.0
        %2164 = vmatprep.subr.mxu0 0.0
        %2165 = vmatpush1.msra.mxu0 0.0
        %2166 = vmatprep.subr.mxu0 0.0
        %2167 = vmatpush1.msra.mxu0 0.0
        %2168 = vmatprep.subr.mxu0 0.0
        %2169 = vmatpush1.msra.mxu0 0.0
        %2170 = vmatprep.subr.mxu0 0.0
        %2171 = vmatpush1.msra.mxu0 0.0
        %2172 = vmatprep.subr.mxu0 0.0
        %2173 = vmatpush1.msra.mxu0 0.0
        %2174 = vmatprep.subr.mxu0 0.0
        %2175 = vmatpush1.msra.mxu0 0.0
        %2176 = vmatprep.subr.mxu0 0.0
        %2177 = vmatpush1.msra.mxu0 0.0
        %2178 = vmatprep.subr.mxu0 0.0
        %2179 = vmatpush1.msra.mxu0 0.0
        %2180 = vmatprep.subr.mxu0 0.0
        %2181 = vmatpush1.msra.mxu0 0.0
        %2182 = vmatprep.subr.mxu0 0.0
        %2183 = vmatpush1.msra.mxu0 0.0
        %2184 = vmatprep.subr.mxu0 0.0
        %2185 = vmatpush1.msra.mxu0 0.0
        %2186 = vmatprep.subr.mxu0 0.0
        %2187 = vmatpush1.msra.mxu0 0.0
        %2188 = vmatprep.mubr.f32.mxu0 0.0
        %2189 = vmatmul.mubr.f32.gmra.mrb[0].mxu0 %v2122
        %v2190 = vpop.f32.mrb[0].mxu0
        %v2191 = vadd.f32 0.0, %v2190
        %v2192 = vpop.f32.mrb[0].mxu0
        %2193 = vdwg.mxu0
        %v2195 = vsel %vm1234, %v1968, 0
        %2197 = vmatprep.subr.mxu0 0.0
        %2198 = vmatpush1.msra.mxu0 %v1974
        %2199 = vmatprep.subr.mxu0 0.0
        %2200 = vmatpush1.msra.mxu0 0.0
        %2201 = vmatprep.subr.mxu0 0.0
        %2202 = vmatpush1.msra.mxu0 0.0
        %2203 = vmatprep.subr.mxu0 0.0
        %2204 = vmatpush1.msra.mxu0 0.0
        %2205 = vmatprep.subr.mxu0 0.0
        %2206 = vmatpush1.msra.mxu0 0.0
        %2207 = vmatprep.subr.mxu0 0.0
        %2208 = vmatpush1.msra.mxu0 0.0
        %2209 = vmatprep.subr.mxu0 0.0
        %2210 = vmatpush1.msra.mxu0 0.0
        %2211 = vmatprep.subr.mxu0 0.0
        %2212 = vmatpush1.msra.mxu0 0.0
        %2213 = vmatprep.subr.mxu0 0.0
        %2214 = vmatpush1.msra.mxu0 0.0
        %2215 = vmatprep.subr.mxu0 0.0
        %2216 = vmatpush1.msra.mxu0 0.0
        %2217 = vmatprep.subr.mxu0 0.0
        %2218 = vmatpush1.msra.mxu0 0.0
        %2219 = vmatprep.subr.mxu0 0.0
        %2220 = vmatpush1.msra.mxu0 0.0
        %2221 = vmatprep.subr.mxu0 0.0
        %2222 = vmatpush1.msra.mxu0 0.0
        %2223 = vmatprep.subr.mxu0 0.0
        %2224 = vmatpush1.msra.mxu0 0.0
        %2225 = vmatprep.subr.mxu0 0.0
        %2226 = vmatpush1.msra.mxu0 0.0
        %2227 = vmatprep.subr.mxu0 0.0
        %2228 = vmatpush1.msra.mxu0 0.0
        %2229 = vmatprep.subr.mxu0 0.0
        %2230 = vmatpush1.msra.mxu0 0.0
        %2231 = vmatprep.subr.mxu0 0.0
        %2232 = vmatpush1.msra.mxu0 0.0
        %2233 = vmatprep.subr.mxu0 0.0
        %2234 = vmatpush1.msra.mxu0 0.0
        %2235 = vmatprep.subr.mxu0 0.0
        %2236 = vmatpush1.msra.mxu0 0.0
        %2237 = vmatprep.subr.mxu0 0.0
        %2238 = vmatpush1.msra.mxu0 0.0
        %2239 = vmatprep.subr.mxu0 0.0
        %2240 = vmatpush1.msra.mxu0 0.0
        %2241 = vmatprep.subr.mxu0 0.0
        %2242 = vmatpush1.msra.mxu0 0.0
        %2243 = vmatprep.subr.mxu0 0.0
        %2244 = vmatpush1.msra.mxu0 0.0
        %2245 = vmatprep.subr.mxu0 0.0
        %2246 = vmatpush1.msra.mxu0 0.0
        %2247 = vmatprep.subr.mxu0 0.0
        %2248 = vmatpush1.msra.mxu0 0.0
        %2249 = vmatprep.subr.mxu0 0.0
        %2250 = vmatpush1.msra.mxu0 0.0
        %2251 = vmatprep.subr.mxu0 0.0
        %2252 = vmatpush1.msra.mxu0 0.0
        %2253 = vmatprep.subr.mxu0 0.0
        %2254 = vmatpush1.msra.mxu0 0.0
        %2255 = vmatprep.subr.mxu0 0.0
        %2256 = vmatpush1.msra.mxu0 0.0
        %2257 = vmatprep.subr.mxu0 0.0
        %2258 = vmatpush1.msra.mxu0 0.0
        %2259 = vmatprep.subr.mxu0 0.0
        %2260 = vmatpush1.msra.mxu0 0.0
        %2261 = vmatprep.mubr.f32.mxu0 0.0
        %2262 = vmatmul.mubr.f32.gmra.mrb[0].mxu0 %v2195
        %v2263 = vpop.f32.mrb[0].mxu0
        %v2264 = vadd.f32 0.0, %v2263
        %v2265 = vpop.f32.mrb[0].mxu0
        %2266 = vdwg.mxu0
        %v2267 = vsel %vm920, %v2045, 0.0
        %v2268 = vsel %vm920, %v2118, 0.0
        %v2269 = vadd.f32 %v2267, %v2268
        %v2270 = vsel %vm920, %v2191, 0.0
        %v2271 = vadd.f32 %v2269, %v2270
        %v2272 = vsel %vm920, %v2264, 0.0
        %v2273 = vadd.f32 %v2271, %v2272
        %v2274 = vld [vmem:[%s762] sm:$0x1]
        %v2276 = vlaneseq
        %v2277 = vshrl.u32 %v2276, 7
        %v2278 = vsub.s32 0, %v2277
        %v2279 = vrot.slane %v2274, %v2278
        %v2281 = vadd.f32 %v2273, %v2279
        %v2282 = vadd.f32 %v917, %v2281
        %v2283 = vld [vmem:[%s770] sm:$0x1]
        %v2284 = vld [vmem:[%s778] sm:$0x1]
        %v2285 = vsel %vm920, %v2282, 0.0
        %2286 = vadd.xlane.f32.xlu0 %v2285
        %v2287 = vpop.xlane.xlu0 %2286
        %v2288 = vmul.f32 %v2287, %v924
        %v2289 = vsub.f32 %v2282, %v2288
        %v2290 = vmul.f32 %v2289, %v2289
        %v2291 = vsel %vm920, %v2290, 0.0
        %2292 = vadd.xlane.f32.xlu0 %v2291
        %v2293 = vpop.xlane.xlu0 %2292
        %v2294 = vmul.f32 %v2293, %v924
        %v2295 = vadd.f32 %v2294, 1e-05
        %v2296 = vrsqrt.pop %v2295
        %v2297 = vmul.f32 %v2289, %v2296
        %v2299 = vlaneseq
        %v2300 = vshrl.u32 %v2299, 7
        %v2301 = vsub.s32 0, %v2300
        %v2302 = vrot.slane %v2283, %v2301
        %v2304 = vmul.f32 %v2297, %v2302
        %v2306 = vlaneseq
        %v2307 = vshrl.u32 %v2306, 7
        %v2308 = vsub.s32 0, %v2307
        %v2309 = vrot.slane %v2284, %v2308
        %v2311 = vadd.f32 %v2304, %v2309
        %v2312 = vld [vmem:[%s787] sm:$0xff]
        %v2313 = vld [vmem:[%s787 + $0x8] sm:$0xff]
        %v2314 = vld [vmem:[%s787 + $0x10] sm:$0xff]
        %v2315 = vld [vmem:[%s787 + $0x18] sm:$0xff]
        %v2316 = vld [vmem:[%s795] sm:$0x1]
        %v2318 = vlaneseq
        %v2319 = vshrl.u32 %v2318, 7
        %v2320 = vsub.s32 0, %v2319
        %v2321 = vrot.slane %v2316, %v2320
        %v2324 = vsel %vm920, %v2311, 0
        %2326 = vmatprep.subr.mxu0 0.0
        %2327 = vmatpush1.msra.mxu0 %v2312
        %2328 = vmatprep.subr.mxu0 0.0
        %2329 = vmatpush1.msra.mxu0 %v2313
        %2330 = vmatprep.subr.mxu0 0.0
        %2331 = vmatpush1.msra.mxu0 %v2314
        %2332 = vmatprep.subr.mxu0 0.0
        %2333 = vmatpush1.msra.mxu0 %v2315
        %2334 = vmatprep.subr.mxu0 0.0
        %2335 = vmatpush1.msra.mxu0 0.0
        %2336 = vmatprep.subr.mxu0 0.0
        %2337 = vmatpush1.msra.mxu0 0.0
        %2338 = vmatprep.subr.mxu0 0.0
        %2339 = vmatpush1.msra.mxu0 0.0
        %2340 = vmatprep.subr.mxu0 0.0
        %2341 = vmatpush1.msra.mxu0 0.0
        %2342 = vmatprep.subr.mxu0 0.0
        %2343 = vmatpush1.msra.mxu0 0.0
        %2344 = vmatprep.subr.mxu0 0.0
        %2345 = vmatpush1.msra.mxu0 0.0
        %2346 = vmatprep.subr.mxu0 0.0
        %2347 = vmatpush1.msra.mxu0 0.0
        %2348 = vmatprep.subr.mxu0 0.0
        %2349 = vmatpush1.msra.mxu0 0.0
        %2350 = vmatprep.subr.mxu0 0.0
        %2351 = vmatpush1.msra.mxu0 0.0
        %2352 = vmatprep.subr.mxu0 0.0
        %2353 = vmatpush1.msra.mxu0 0.0
        %2354 = vmatprep.subr.mxu0 0.0
        %2355 = vmatpush1.msra.mxu0 0.0
        %2356 = vmatprep.subr.mxu0 0.0
        %2357 = vmatpush1.msra.mxu0 0.0
        %2358 = vmatprep.subr.mxu0 0.0
        %2359 = vmatpush1.msra.mxu0 0.0
        %2360 = vmatprep.subr.mxu0 0.0
        %2361 = vmatpush1.msra.mxu0 0.0
        %2362 = vmatprep.subr.mxu0 0.0
        %2363 = vmatpush1.msra.mxu0 0.0
        %2364 = vmatprep.subr.mxu0 0.0
        %2365 = vmatpush1.msra.mxu0 0.0
        %2366 = vmatprep.subr.mxu0 0.0
        %2367 = vmatpush1.msra.mxu0 0.0
        %2368 = vmatprep.subr.mxu0 0.0
        %2369 = vmatpush1.msra.mxu0 0.0
        %2370 = vmatprep.subr.mxu0 0.0
        %2371 = vmatpush1.msra.mxu0 0.0
        %2372 = vmatprep.subr.mxu0 0.0
        %2373 = vmatpush1.msra.mxu0 0.0
        %2374 = vmatprep.subr.mxu0 0.0
        %2375 = vmatpush1.msra.mxu0 0.0
        %2376 = vmatprep.subr.mxu0 0.0
        %2377 = vmatpush1.msra.mxu0 0.0
        %2378 = vmatprep.subr.mxu0 0.0
        %2379 = vmatpush1.msra.mxu0 0.0
        %2380 = vmatprep.subr.mxu0 0.0
        %2381 = vmatpush1.msra.mxu0 0.0
        %2382 = vmatprep.subr.mxu0 0.0
        %2383 = vmatpush1.msra.mxu0 0.0
        %2384 = vmatprep.subr.mxu0 0.0
        %2385 = vmatpush1.msra.mxu0 0.0
        %2386 = vmatprep.subr.mxu0 0.0
        %2387 = vmatpush1.msra.mxu0 0.0
        %2388 = vmatprep.subr.mxu0 0.0
        %2389 = vmatpush1.msra.mxu0 0.0
        %2390 = vmatprep.mubr.f32.mxu0 0.0
        %2391 = vmatmul.mubr.f32.gmra.mrb[0].mxu0 %v2324
        %v2392 = vpop.f32.mrb[0].mxu0
        %v2393 = vadd.f32 %v2321, %v2392
        %v2394 = vpop.f32.mrb[0].mxu0
        %2395 = vdwg.mxu0
        %v2396 = vmul.f32 %v2393, 1.702
        %v2397 = vxor.u32 %v2396, 2147483648
        %v2398 = vmul.f32 %v2397, 1.442695
        %v2399 = vpow.pop %v2398
        %v2400 = vadd.f32 %v2399, 1.0
        %v2401 = vrcp.pop %v2400
        %v2402 = vmul.f32 1.0, %v2401
        %v2403 = vmul.f32 %v2393, %v2402
        %v2404 = vld [vmem:[%s804] sm:$0xff]
        %v2405 = vld [vmem:[%s804 + $0x8] sm:$0xff]
        %v2406 = vld [vmem:[%s804 + $0x10] sm:$0xff]
        %v2407 = vld [vmem:[%s804 + $0x18] sm:$0xff]
        %v2408 = vld [vmem:[%s804 + $0x20] sm:$0xff]
        %v2409 = vld [vmem:[%s804 + $0x28] sm:$0xff]
        %v2410 = vld [vmem:[%s804 + $0x30] sm:$0xff]
        %v2411 = vld [vmem:[%s804 + $0x38] sm:$0xff]
        %v2412 = vld [vmem:[%s804 + $0x40] sm:$0xff]
        %v2413 = vld [vmem:[%s804 + $0x48] sm:$0xff]
        %v2414 = vld [vmem:[%s804 + $0x50] sm:$0xff]
        %v2415 = vld [vmem:[%s804 + $0x58] sm:$0xff]
        %v2416 = vld [vmem:[%s804 + $0x60] sm:$0xff]
        %v2417 = vld [vmem:[%s804 + $0x68] sm:$0xff]
        %v2418 = vld [vmem:[%s804 + $0x70] sm:$0xff]
        %v2419 = vld [vmem:[%s804 + $0x78] sm:$0xff]
        %2420 = vmatprep.subr.mxu0 0.0
        %2421 = vmatpush1.msra.mxu0 %v2404
        %2422 = vmatprep.subr.mxu0 0.0
        %2423 = vmatpush1.msra.mxu0 %v2405
        %2424 = vmatprep.subr.mxu0 0.0
        %2425 = vmatpush1.msra.mxu0 %v2406
        %2426 = vmatprep.subr.mxu0 0.0
        %2427 = vmatpush1.msra.mxu0 %v2407
        %2428 = vmatprep.subr.mxu0 0.0
        %2429 = vmatpush1.msra.mxu0 %v2408
        %2430 = vmatprep.subr.mxu0 0.0
        %2431 = vmatpush1.msra.mxu0 %v2409
        %2432 = vmatprep.subr.mxu0 0.0
        %2433 = vmatpush1.msra.mxu0 %v2410
        %2434 = vmatprep.subr.mxu0 0.0
        %2435 = vmatpush1.msra.mxu0 %v2411
        %2436 = vmatprep.subr.mxu0 0.0
        %2437 = vmatpush1.msra.mxu0 %v2412
        %2438 = vmatprep.subr.mxu0 0.0
        %2439 = vmatpush1.msra.mxu0 %v2413
        %2440 = vmatprep.subr.mxu0 0.0
        %2441 = vmatpush1.msra.mxu0 %v2414
        %2442 = vmatprep.subr.mxu0 0.0
        %2443 = vmatpush1.msra.mxu0 %v2415
        %2444 = vmatprep.subr.mxu0 0.0
        %2445 = vmatpush1.msra.mxu0 %v2416
        %2446 = vmatprep.subr.mxu0 0.0
        %2447 = vmatpush1.msra.mxu0 %v2417
        %2448 = vmatprep.subr.mxu0 0.0
        %2449 = vmatpush1.msra.mxu0 %v2418
        %2450 = vmatprep.subr.mxu0 0.0
        %2451 = vmatpush1.msra.mxu0 %v2419
        %2452 = vmatprep.subr.mxu0 0.0
        %2453 = vmatpush1.msra.mxu0 0.0
        %2454 = vmatprep.subr.mxu0 0.0
        %2455 = vmatpush1.msra.mxu0 0.0
        %2456 = vmatprep.subr.mxu0 0.0
        %2457 = vmatpush1.msra.mxu0 0.0
        %2458 = vmatprep.subr.mxu0 0.0
        %2459 = vmatpush1.msra.mxu0 0.0
        %2460 = vmatprep.subr.mxu0 0.0
        %2461 = vmatpush1.msra.mxu0 0.0
        %2462 = vmatprep.subr.mxu0 0.0
        %2463 = vmatpush1.msra.mxu0 0.0
        %2464 = vmatprep.subr.mxu0 0.0
        %2465 = vmatpush1.msra.mxu0 0.0
        %2466 = vmatprep.subr.mxu0 0.0
        %2467 = vmatpush1.msra.mxu0 0.0
        %2468 = vmatprep.subr.mxu0 0.0
        %2469 = vmatpush1.msra.mxu0 0.0
        %2470 = vmatprep.subr.mxu0 0.0
        %2471 = vmatpush1.msra.mxu0 0.0
        %2472 = vmatprep.subr.mxu0 0.0
        %2473 = vmatpush1.msra.mxu0 0.0
        %2474 = vmatprep.subr.mxu0 0.0
        %2475 = vmatpush1.msra.mxu0 0.0
        %2476 = vmatprep.subr.mxu0 0.0
        %2477 = vmatpush1.msra.mxu0 0.0
        %2478 = vmatprep.subr.mxu0 0.0
        %2479 = vmatpush1.msra.mxu0 0.0
        %2480 = vmatprep.subr.mxu0 0.0
        %2481 = vmatpush1.msra.mxu0 0.0
        %2482 = vmatprep.subr.mxu0 0.0
        %2483 = vmatpush1.msra.mxu0 0.0
        %2484 = vmatprep.mubr.f32.mxu0 0.0
        %2485 = vmatmul.mubr.f32.gmra.mrb[0].mxu0 %v2403
        %v2486 = vpop.f32.mrb[0].mxu0
        %v2487 = vadd.f32 0.0, %v2486
        %v2488 = vpop.f32.mrb[0].mxu0
        %2489 = vdwg.mxu0
        %v2490 = vadd.f32 %v2282, %v2487
        %v2491 = vld [vmem:[%s812] sm:$0x1]
        %v2493 = vlaneseq
        %v2494 = vshrl.u32 %v2493, 7
        %v2495 = vsub.s32 0, %v2494
        %v2496 = vrot.slane %v2491, %v2495
        %v2498 = vadd.f32 %v2490, %v2496
        %2499 = vst.msk [vmem:[%s909] sm:$0xff] %vm920, %v2498
        %s2500 = sand.u32 %s411, 1
        %s2501 = scalar_lea.sflag [#allocation4], %s2500
        %s2502 = sand.u32 %s411, 1
        %s2503 = smul.addr %s2502, 8
        %s2504 = scalar_lea.vmem [#allocation19], %s2503
        // Predicated region
        $region137: #{_lambda_.1} parent=75 // pred_check
          %p2505 = pneg %p421
        $region138: #{_lambda_.1} parent=75 // pred_check_branch
          %2507 = sbr.rel (%p2505) target = $region140
        $region139: #{_lambda_.1} parent=75 // pred_region
          %s2509 = ssub.s32 128, 128
          %2510 = vsyncadd %s2501, %s2509
          %s2511 = smul.addr %s36, 128
          %s2512 = scalar_lea.hbm %s14, %s2511
          %s2514 = sshll.u32 %s2504, 4
          %s2515 = int_to_ptr.vmem [resolvable:$true] %s2514
          %2517 = dma.vmem_to_hbm [thread:$0]  %s2515, 128, %s2512, %s2501
        $region140: #{_lambda_.1} parent=75 // pred_fallthru
          _
      $region76: #{_lambda_.1} parent=5 // pred_fallthru
        _
      %p2518 = scmp.le.s32.totalorder 2, %s27
      // Predicated region
      $region141: #{_lambda_.1} parent=5 // pred_check
        %p2519 = pneg %p2518
      $region142: #{_lambda_.1} parent=5 // pred_check_branch
        %2521 = sbr.rel (%p2519) target = $region144
      $region143: #{_lambda_.1} parent=5 // pred_region
        %s2522 = ssub.s32 %s27, 2
        // Predicated region
        $region145: #{_lambda_.1} parent=143 // pred_check
          %p2523 = pneg %p427
        $region146: #{_lambda_.1} parent=143 // pred_check_branch
          %2525 = sbr.rel (%p2523) target = $region148
        $region147: #{_lambda_.1} parent=143 // pred_region
          %s2526 = sand.u32 %s412, 1
          %s2527 = scalar_lea.sflag [#allocation4], %s2526
          %s2528 = sand.u32 %s412, 1
          %s2529 = smul.addr %s2528, 8
          %s2530 = scalar_lea.vmem [#allocation19], %s2529
          %2531 = dma.done %s2527, 128
        $region148: #{_lambda_.1} parent=143 // pred_fallthru
          _
      $region144: #{_lambda_.1} parent=5 // pred_fallthru
        _
    $region6: #{_lambda_.1} parent=1 // loop_footer
      %s31 = sadd.s32 1, %s27
    $region7: #{_lambda_.1} parent=1 // loop_footer_branch
      %26 = sbr.rel target = $region3
    $region8: #{_lambda_.1} parent=1 // loop_exit
      _
    %2532 = vsyncpa [#allocation3], 1
    %s2533 = scalar_lea.sflag [#allocation3], 1
    %2534 = vsyncpa %s2533, 1
    %2535 = vsyncpa [#allocation6], 1
    %2536 = vsyncpa [#allocation4], 1
    %s2537 = scalar_lea.sflag [#allocation4], 1
    %2538 = vsyncpa %s2537, 1

</llo_original>
